<compile_context>
chip_gen: v6e
topology: v6e:2x2x1
jax: 0.10.0
libtpu: 0.0.40
codegen_flags: <defaults>
</compile_context>

<pallas_src>
import jax
import jax.numpy as jnp
from jax import lax
from jax.experimental import pallas as pl
from jax.experimental.pallas import tpu as pltpu


# ----------------------------------------------------------------------------- compute

def _im2col_matmul(xp, w_ref, b_ref, out_dtype, th, w, c):
    """Fused depthwise+pointwise conv on one padded slab.

    xp: (th+2, w+2, c) zero-padded NHWC slab (native dtype).
    Returns the (Cout, th*w) output tile with the spatial axis on lanes."""
    cols = []
    for dy in range(3):
        for dx in range(3):                        # k = dy*3 + dx matches the weight fold
            cols.append(xp[dy:dy + th, dx:dx + w, :].reshape(th * w, c))
    xk = jnp.concatenate(cols, axis=-1)            # (th*w, 9c) im2col tile
    acc = jnp.dot(xk, w_ref[...], preferred_element_type=jnp.float32)   # one MXU pass
    acc = acc + b_ref[...].astype(jnp.float32)     # (th*w, Cout) + (1, Cout)
    # Cast BEFORE the transpose (halves XLU/store bytes for 16-bit outputs); the
    # transpose puts the spatial axis on lanes -> unmasked full-lane stores.
    return acc.astype(out_dtype).T                 # (Cout, th*w)


def _whole_image_kernel(x_ref, w_ref, b_ref, out_ref):
    # x_ref  : (TB, H+2, W+2, Cin)   zero-padded NHWC images (native dtype)
    # w_ref  : (9*Cin, Cout)         folded depthwise*pointwise weight
    # b_ref  : (1, Cout)             folded bias (f32)
    # out_ref: (TB, Cout, H*W)       lane-dense NCHW-flattened output block
    tb, hp2, wp2, c = x_ref.shape
    h, w = hp2 - 2, wp2 - 2
    for i in range(tb):                            # static unroll; TB is small (<= 8)
        out_ref[i] = _im2col_matmul(x_ref[i], w_ref, b_ref, out_ref.dtype, h, w, c)


def _make_halo_kernel(th, w, c, rows_per_image):
    """H-tiled path: the padded input stays in HBM; the kernel DMAs each (th+2)-row halo
    window into a manually double-buffered VMEM slab (prefetch t+1 while computing t)."""

    def kernel(x_hbm, w_ref, b_ref, out_ref, xbuf, sem):
        # x_hbm : (B*(H+2), W+2, Cin) in HBM       xbuf: (2, th+2, W+2, Cin) VMEM scratch
        b = pl.program_id(0)
        t = pl.program_id(1)
        n_t = pl.num_programs(1)
        slot = t % 2

        def halo_copy(ti, s):
            row0 = b * rows_per_image + ti * th
            return pltpu.make_async_copy(
                x_hbm.at[pl.ds(row0, th + 2)], xbuf.at[s], sem.at[s])

        @pl.when(t == 0)                           # prime at the first row-tile of each image
        def _():
            halo_copy(0, 0).start()

        halo_copy(t, slot).wait()                  # current halo window must be resident

        @pl.when(t + 1 < n_t)                      # prefetch next row-tile of the same image
        def _():
            halo_copy(t + 1, 1 - slot).start()

        out_ref[0] = _im2col_matmul(xbuf[slot], w_ref, b_ref, out_ref.dtype, th, w, c)

    return kernel


# ------------------------------------------------------------------------------ sizing

def _padded_bytes(shape, itemsize):
    """VMEM footprint of a buffer including (sublane, lane) tile padding."""
    if not shape:
        return itemsize
    lane = -(-shape[-1] // 128) * 128
    sub_mult = 8 * max(1, 4 // itemsize)           # f32: 8, bf16: 16, int8/fp8: 32
    sub = (-(-shape[-2] // sub_mult) * sub_mult) if len(shape) >= 2 else 1
    lead = 1
    for d in shape[:-2]:
        lead *= int(d)
    return lead * sub * lane * itemsize


def _vmem_budget():
    """Generation-aware (per-step working-set budget, scoped-VMEM limit), in bytes."""
    phys = 64 << 20                                # conservative default (v7x-sized)
    try:
        phys = int(pltpu.get_tpu_info().vmem_capacity_bytes)
    except Exception:
        pass
    if phys >= (96 << 20):                         # v5e / v6e: 128 MiB physical VMEM
        return 40 << 20, 80 << 20
    return 24 << 20, 44 << 20                      # v7x: 64 MiB physical VMEM


def _step_bytes(tb, th, W, C, Co, itemsize):
    """Per-grid-step working set, (8,128)-padded, double buffers included."""
    x_in = 2 * _padded_bytes((tb, th + 2, W + 2, C), itemsize)
    out = 2 * _padded_bytes((tb, Co, th * W), itemsize)
    wgt = 2 * _padded_bytes((9 * C, Co), itemsize) + _padded_bytes((1, Co), 4)
    im2col = _padded_bytes((th * W, 9 * C), itemsize)
    acc = _padded_bytes((th * W, Co), 4)
    tposed = _padded_bytes((Co, th * W), itemsize)
    return x_in + out + wgt + 2 * im2col + acc + tposed


def _plan_tiling(B, C, H, W, Co, itemsize, budget, row_block):
    """Returns (mode, batch_block, row_tile)."""
    if row_block is not None:                      # explicit override (used by the test)
        if row_block >= H:
            return "whole", 1, H
        assert H % row_block == 0 and (row_block * W) % 128 == 0, (
            "row_block must divide H and keep row_block*W a multiple of 128")
        return "halo", 1, row_block
    if _step_bytes(1, H, W, C, Co, itemsize) <= budget:
        tb = 1
        for cand in range(min(B, 8), 0, -1):       # cap unroll; keep >= 2 steps when B >= 2
            if B % cand:
                continue
            if B >= 2 and B // cand < 2:
                continue
            if _step_bytes(cand, H, W, C, Co, itemsize) <= budget:
                tb = cand
                break
        return "whole", tb, H
    for th in range(H - 1, 0, -1):                 # largest lane-dense row tile that fits
        if H % th or (th * W) % 128:
            continue
        if _step_bytes(1, th, W, C, Co, itemsize) <= budget:
            return "halo", 1, th
    # No lane-dense row tiling exists (e.g. W not 128-friendly): fall back to whole
    # images and rely on the raised scoped-VMEM limit.
    return "whole", 1, H


# ----------------------------------------------------------------------------- wrapper

def depth_point_conv(x_nchw, dw_w, dw_b, pw_w, pw_b, *, row_block=None):
    """Forward pass of DepthPointConv.

    x_nchw: (B, Cin, H, W);  dw_w: (Cin, 1, 3, 3);  dw_b: (Cin,)
    pw_w: (Cout, Cin, 1, 1); pw_b: (Cout,).  Returns (B, Cout, H, W)."""
    B, C, H, W = x_nchw.shape
    Co = pw_w.shape[0]
    itemsize = x_nchw.dtype.itemsize

    budget, vmem_limit = _vmem_budget()
    mode, TB, TH = _plan_tiling(B, C, H, W, Co, itemsize, budget, row_block)

    # Layout plumbing (one fused XLA pass): NCHW -> NHWC + zero pad.  No duplicated halo
    # slabs are materialized in either path.  (Odd W stays correct but loses the
    # layout-preserving reshape / lane-dense stores — a perf cliff, not a numerics bug.)
    x_pad = jnp.pad(jnp.transpose(x_nchw, (0, 2, 3, 1)),
                    ((0, 0), (1, 1), (1, 1), (0, 0)))                    # (B, H+2, W+2, C)

    # Fold the depthwise taps and both biases into the pointwise weight (once, in f32).
    pw_mat = pw_w[:, :, 0, 0].astype(jnp.float32).T                      # (Cin, Cout)
    taps = jnp.transpose(dw_w[:, 0, :, :], (1, 2, 0)).reshape(9, C)      # (9, Cin), k=dy*3+dx
    w_fold = (taps.astype(jnp.float32)[:, :, None] * pw_mat[None]
              ).reshape(9 * C, Co).astype(x_nchw.dtype)                  # (9*Cin, Cout)
    b_fold = (pw_b.astype(jnp.float32)
              + dw_b.astype(jnp.float32) @ pw_mat).reshape(1, Co)        # (1, Cout), f32

    out_shape = jax.ShapeDtypeStruct((B, Co, H * W), x_nchw.dtype)

    if mode == "whole":
        out_flat = pl.pallas_call(
            _whole_image_kernel,
            out_shape=out_shape,
            grid_spec=pltpu.PrefetchScalarGridSpec(
                num_scalar_prefetch=0,
                grid=(B // TB,),
                in_specs=[
                    pl.BlockSpec((TB, H + 2, W + 2, C), lambda i: (i, 0, 0, 0)),
                    pl.BlockSpec((9 * C, Co), lambda i: (0, 0)),
                    pl.BlockSpec((1, Co), lambda i: (0, 0)),
                ],
                out_specs=pl.BlockSpec((TB, Co, H * W), lambda i: (i, 0, 0)),
            ),
            compiler_params=pltpu.CompilerParams(
                dimension_semantics=("parallel",),
                vmem_limit_bytes=vmem_limit),
        )(x_pad, w_fold, b_fold)
    else:
        n_th = H // TH
        x_rows = x_pad.reshape(B * (H + 2), W + 2, C)        # free contiguous reshape
        out_flat = pl.pallas_call(
            _make_halo_kernel(TH, W, C, H + 2),
            out_shape=out_shape,
            grid_spec=pltpu.PrefetchScalarGridSpec(
                num_scalar_prefetch=0,
                grid=(B, n_th),
                in_specs=[
                    pl.BlockSpec(memory_space=pl.ANY),       # padded input stays in HBM
                    pl.BlockSpec((9 * C, Co), lambda b, t: (0, 0)),
                    pl.BlockSpec((1, Co), lambda b, t: (0, 0)),
                ],
                out_specs=pl.BlockSpec((1, Co, TH * W), lambda b, t: (b, 0, t)),
                scratch_shapes=[
                    pltpu.VMEM((2, TH + 2, W + 2, C), x_nchw.dtype),
                    pltpu.SemaphoreType.DMA((2,)),
                ],
            ),
            compiler_params=pltpu.CompilerParams(
                dimension_semantics=("parallel", "arbitrary"),
                vmem_limit_bytes=vmem_limit),
        )(x_rows, w_fold, b_fold)

    # (B, Cout, H*W) is already NCHW element order: free reshape, no output transpose.
    return out_flat.reshape(B, Co, H, W)


# --------------------------------------------------------------------------- reference

def _reference(x, dw_w, dw_b, pw_w, pw_b):
    # Pure-JAX reference mirroring the PyTorch module semantics (NCHW convs).
    y = lax.conv_general_dilated(
        x, dw_w, window_strides=(1, 1), padding="SAME",
        dimension_numbers=("NCHW", "OIHW", "NCHW"),
        feature_group_count=x.shape[1])
    y = y + dw_b[None, :, None, None]
    z = lax.conv_general_dilated(
        y, pw_w, window_strides=(1, 1), padding="VALID",
        dimension_numbers=("NCHW", "OIHW", "NCHW"))
    return z + pw_b[None, :, None, None]


if __name__ == "__main__":
    key = jax.random.PRNGKey(0)
    B, Cin, Cout, H, W = 2, 4, 8, 16, 16

    k_x, k_dw, k_db, k_pw, k_pb = jax.random.split(key, 5)
    x = jax.random.normal(k_x, (B, Cin, H, W), jnp.float32)

    # Deterministic synthetic parameters (PyTorch-like fan-in scaled uniform).
    dw_bound = 1.0 / (1 * 3 * 3) ** 0.5
    pw_bound = 1.0 / (Cin * 1 * 1) ** 0.5
    dw_w = jax.random.uniform(k_dw, (Cin, 1, 3, 3), jnp.float32, -dw_bound, dw_bound)
    dw_b = jax.random.uniform(k_db, (Cin,), jnp.float32, -dw_bound, dw_bound)
    pw_w = jax.random.uniform(k_pw, (Cout, Cin, 1, 1), jnp.float32, -pw_bound, pw_bound)
    pw_b = jax.random.uniform(k_pb, (Cout,), jnp.float32, -pw_bound, pw_bound)

    ref = _reference(x, dw_w, dw_b, pw_w, pw_b)

    # Path 1: whole-image, batch-blocked, auto-pipelined BlockSpec path.
    out = depth_point_conv(x, dw_w, dw_b, pw_w, pw_b)
    jax.block_until_ready(out)
    assert out.shape == (B, Cout, H, W)
    assert float(jnp.max(jnp.abs(out - ref))) < 1e-3

    # Path 2: H-tiled manual-DMA halo path (row tile forced small to exercise it).
    out_tiled = depth_point_conv(x, dw_w, dw_b, pw_w, pw_b, row_block=8)
    jax.block_until_ready(out_tiled)
    assert float(jnp.max(jnp.abs(out_tiled - ref))) < 1e-3

    print("KERNEL_OK")
</pallas_src>

<mosaic_0001>
module attributes {stable_mosaic.version = 11 : i64} {
  func.func @_whole_image_kernel(%arg0: i32, %arg1: memref<1x18x18x4xf32, #tpu.memory_space<vmem>>, %arg2: memref<36x8xf32, #tpu.memory_space<vmem>>, %arg3: memref<1x8xf32, #tpu.memory_space<vmem>>, %arg4: memref<1x8x256xf32, #tpu.memory_space<vmem>>) attributes {dimension_semantics = [#tpu.dimension_semantics<parallel>], iteration_bounds = array<i64: 2>, scalar_prefetch = 0 : i64, scratch_operands = 0 : i64, tpu.core_type = #tpu.core_type<tc>, window_params = [{transform_indices = @transform_0, window_bounds = array<i64: 1, 18, 18, 4>}, {pipeline_mode = #tpu.pipeline_mode<synchronous>, transform_indices = @transform_1, window_bounds = array<i64: 36, 8>}, {pipeline_mode = #tpu.pipeline_mode<synchronous>, transform_indices = @transform_2, window_bounds = array<i64: 1, 8>}, {transform_indices = @transform_3, window_bounds = array<i64: 1, 8, 256>}]} {
    %c0 = arith.constant 0 : index
    %c0_0 = arith.constant 0 : index
    %c0_1 = arith.constant 0 : index
    %c0_2 = arith.constant 0 : index
    %0 = vector.load %arg1[%c0, %c0_0, %c0_1, %c0_2] : memref<1x18x18x4xf32, #tpu.memory_space<vmem>>, vector<1x18x18x4xf32>
    %1 = vector.shape_cast %0 : vector<1x18x18x4xf32> to vector<18x18x4xf32>
    %2 = vector.extract_strided_slice %1 {offsets = [0, 0, 0], sizes = [16, 16, 4], strides = [1, 1, 1]} : vector<18x18x4xf32> to vector<16x16x4xf32>
    %3 = vector.shape_cast %2 : vector<16x16x4xf32> to vector<256x4xf32>
    %4 = vector.extract_strided_slice %1 {offsets = [0, 1, 0], sizes = [16, 16, 4], strides = [1, 1, 1]} : vector<18x18x4xf32> to vector<16x16x4xf32>
    %5 = vector.shape_cast %4 : vector<16x16x4xf32> to vector<256x4xf32>
    %6 = vector.extract_strided_slice %1 {offsets = [0, 2, 0], sizes = [16, 16, 4], strides = [1, 1, 1]} : vector<18x18x4xf32> to vector<16x16x4xf32>
    %7 = vector.shape_cast %6 : vector<16x16x4xf32> to vector<256x4xf32>
    %8 = vector.extract_strided_slice %1 {offsets = [1, 0, 0], sizes = [16, 16, 4], strides = [1, 1, 1]} : vector<18x18x4xf32> to vector<16x16x4xf32>
    %9 = vector.shape_cast %8 : vector<16x16x4xf32> to vector<256x4xf32>
    %10 = vector.extract_strided_slice %1 {offsets = [1, 1, 0], sizes = [16, 16, 4], strides = [1, 1, 1]} : vector<18x18x4xf32> to vector<16x16x4xf32>
    %11 = vector.shape_cast %10 : vector<16x16x4xf32> to vector<256x4xf32>
    %12 = vector.extract_strided_slice %1 {offsets = [1, 2, 0], sizes = [16, 16, 4], strides = [1, 1, 1]} : vector<18x18x4xf32> to vector<16x16x4xf32>
    %13 = vector.shape_cast %12 : vector<16x16x4xf32> to vector<256x4xf32>
    %14 = vector.extract_strided_slice %1 {offsets = [2, 0, 0], sizes = [16, 16, 4], strides = [1, 1, 1]} : vector<18x18x4xf32> to vector<16x16x4xf32>
    %15 = vector.shape_cast %14 : vector<16x16x4xf32> to vector<256x4xf32>
    %16 = vector.extract_strided_slice %1 {offsets = [2, 1, 0], sizes = [16, 16, 4], strides = [1, 1, 1]} : vector<18x18x4xf32> to vector<16x16x4xf32>
    %17 = vector.shape_cast %16 : vector<16x16x4xf32> to vector<256x4xf32>
    %18 = vector.extract_strided_slice %1 {offsets = [2, 2, 0], sizes = [16, 16, 4], strides = [1, 1, 1]} : vector<18x18x4xf32> to vector<16x16x4xf32>
    %19 = vector.shape_cast %18 : vector<16x16x4xf32> to vector<256x4xf32>
    %20 = tpu.concatenate %3, %5, %7, %9, %11, %13, %15, %17, %19 in 1 : vector<256x4xf32>, vector<256x4xf32>, vector<256x4xf32>, vector<256x4xf32>, vector<256x4xf32>, vector<256x4xf32>, vector<256x4xf32>, vector<256x4xf32>, vector<256x4xf32> -> vector<256x36xf32>
    %c0_3 = arith.constant 0 : index
    %c0_4 = arith.constant 0 : index
    %21 = vector.load %arg2[%c0_3, %c0_4] : memref<36x8xf32, #tpu.memory_space<vmem>>, vector<36x8xf32>
    %cst = arith.constant dense<0.000000e+00> : vector<256x8xf32>
    %22 = tpu.matmul %20, %21, %cst {dimension_numbers = #tpu.dot_dimension_numbers<[1], [0], [0], [1], [0, 0, 1, 1], [], []>} : vector<256x36xf32>, vector<36x8xf32>, vector<256x8xf32> -> vector<256x8xf32>
    %c0_5 = arith.constant 0 : index
    %c0_6 = arith.constant 0 : index
    %23 = vector.load %arg3[%c0_5, %c0_6] : memref<1x8xf32, #tpu.memory_space<vmem>>, vector<1x8xf32>
    %24 = vector.broadcast %23 : vector<1x8xf32> to vector<256x8xf32>
    %25 = arith.addf %22, %24 : vector<256x8xf32>
    %26 = tpu.transpose %25, [1, 0] : vector<256x8xf32> -> vector<8x256xf32>
    %c0_7 = arith.constant 0 : index
    %c0_8 = arith.constant 0 : index
    %c0_9 = arith.constant 0 : index
    %27 = vector.load %arg4[%c0_7, %c0_8, %c0_9] : memref<1x8x256xf32, #tpu.memory_space<vmem>>, vector<1x8x256xf32>
    %28 = vector.shape_cast %27 : vector<1x8x256xf32> to vector<8x256xf32>
    %29 = vector.shape_cast %26 : vector<8x256xf32> to vector<1x8x256xf32>
    tpu.vector_store %arg4[%c0_7, %c0_8, %c0_9], %29 {strides = array<i32>} : memref<1x8x256xf32, #tpu.memory_space<vmem>>, vector<1x8x256xf32>,
    return
  }
  func.func @transform_0(%arg0: i32) -> (i32, i32, i32, i32) {
    %c0_i32 = arith.constant 0 : i32
    %c0_i32_0 = arith.constant 0 : i32
    %c0_i32_1 = arith.constant 0 : i32
    %c0_i32_2 = arith.constant 0 : i32
    return %arg0, %c0_i32, %c0_i32_0, %c0_i32_1 : i32, i32, i32, i32
  }
  func.func @transform_1(%arg0: i32) -> (i32, i32) {
    %c0_i32 = arith.constant 0 : i32
    %c0_i32_0 = arith.constant 0 : i32
    %c0_i32_1 = arith.constant 0 : i32
    return %c0_i32, %c0_i32_0 : i32, i32
  }
  func.func @transform_2(%arg0: i32) -> (i32, i32) {
    %c0_i32 = arith.constant 0 : i32
    %c0_i32_0 = arith.constant 0 : i32
    %c0_i32_1 = arith.constant 0 : i32
    return %c0_i32, %c0_i32_0 : i32, i32
  }
  func.func @transform_3(%arg0: i32) -> (i32, i32, i32) {
    %c0_i32 = arith.constant 0 : i32
    %c0_i32_0 = arith.constant 0 : i32
    %c0_i32_1 = arith.constant 0 : i32
    return %arg0, %c0_i32, %c0_i32_0 : i32, i32, i32
  }
}

</mosaic_0001>

<llo_original>
// kernel: tpu_custom_call.1
$region0: #{tpu_custom_call.1}
  #allocation0 [shape = 'u32[]', space=smem, size = 0x4, offset = 0x4, fixed_abs, tag = 'smem constant byte address 0x4 - core index']
  #allocation1 [shape = 'u32[144,128]{1,0:T(1,128)}', space=vmem, size = 0x12000, scoped, tag = 'internal scratch']
  %s0 = inlined_call_operand.vmem [shape: f32[2,18,18,4], index: 0, kind: input, shape index: {}]
  %s1 = inlined_call_operand.vmem [shape: f32[36,8], index: 1, kind: input, shape index: {}]
  %s2 = inlined_call_operand.vmem [shape: f32[1,8], index: 2, kind: input, shape index: {}]
  %s3 = inlined_call_operand.hbm [shape: f32[2,8,256], index: 3, kind: output, shape index: {}]
  %s4 = sld [smem:[#allocation0]]
  $region45: #{tpu_custom_call.1} parent=0
    _
  %s6 = ssub.s32 1, %s4
  %s7 = scalar_select 0, %s6, %s4
  $region1: #{tpu_custom_call.1} parent=0
    #allocation2 [shape = 'u8[16384]{0}', space=vmem, size = 0x4000, scoped, tag = 'output window, operand 0']
    #allocation3 [shape = 's32[2]{0}', space=sflag, size = 0x8, scoped, tag = 'scoped memory for tpu_custom_call.1']
    %8 = vsyncpa [#allocation3], 0
    %s9 = scalar_lea.sflag [#allocation3], 1
    %10 = vsyncpa %s9, 0
    loop: start=0, step=1, limit=4
    $region2: #{tpu_custom_call.1} parent=1 // loop_pre_header
      _
    $region3: #{tpu_custom_call.1} parent=1 // loop_header
      %s12 = sphi 0, %s16
      %p13 = scmp.ge.s32.totalorder %s12, 4
      %s22 = sphi 0, %s24
      %s25 = sphi 0, %s22
      %s26 = sphi 0, %s25
      %s42 = sphi 0, %s26
      %s46 = sphi 0, %s46
      %s48 = sphi 0, %s46
      %s49 = sphi 0, %s48
      %s63 = sphi 0, %s49
      %s67 = sphi 0, %s67
      %s69 = sphi 0, %s67
      %s70 = sphi 0, %s69
      %s84 = sphi 0, %s70
      %s90 = sphi 0, %s92
      %s93 = sphi 0, %s90
      %s94 = sphi 0, %s93
      %s110 = sphi 0, %s94
    $region4: #{tpu_custom_call.1} parent=1 // loop_header_branch
      %15 = sbr.rel (%p13) target = $region8
    $region5: #{tpu_custom_call.1} parent=1 // loop_body
      %s17 = ssub.s32 %s12, 1
      %s18 = ssub.s32 %s12, 2
      %s19 = sadd.s32 %s12, 1
      %s20 = ssub.s32 %s12, %s19
      %p21 = scmp.eq.s32.totalorder %s20, 0
      %s23 = sadd.s32 %s22, 1
      %s24 = scalar_select %p21, %s22, %s23
      %p27 = pneg %p21
      %p28 = scmp.eq.s32.totalorder %s12, 1
      %p29 = por %p27, %p28
      %p30 = scmp.ne.s32.totalorder %s22, %s25
      %p31 = scmp.eq.s32.totalorder %s12, 0
      %p32 = por %p30, %p31
      %p33 = scmp.ne.s32.totalorder %s22, %s25
      %p34 = scmp.eq.s32.totalorder %s17, 1
      %p35 = por %p33, %p34
      %p36 = scmp.ne.s32.totalorder %s25, %s26
      %p37 = scmp.eq.s32.totalorder %s17, 0
      %p38 = por %p36, %p37
      %p39 = scmp.ne.s32.totalorder %s25, %s26
      %p40 = scmp.eq.s32.totalorder %s18, 1
      %p41 = por %p39, %p40
      %p43 = scmp.ne.s32.totalorder %s26, %s42
      %p44 = scmp.eq.s32.totalorder %s18, 0
      %p45 = por %p43, %p44
      %s47 = sadd.s32 %s46, 1
      %p50 = scmp.eq.s32.totalorder %s12, 1
      %p51 = scmp.ne.s32.totalorder %s46, %s48
      %p52 = scmp.eq.s32.totalorder %s12, 0
      %p53 = por %p51, %p52
      %p54 = scmp.ne.s32.totalorder %s46, %s48
      %p55 = scmp.eq.s32.totalorder %s17, 1
      %p56 = por %p54, %p55
      %p57 = scmp.ne.s32.totalorder %s48, %s49
      %p58 = scmp.eq.s32.totalorder %s17, 0
      %p59 = por %p57, %p58
      %p60 = scmp.ne.s32.totalorder %s48, %s49
      %p61 = scmp.eq.s32.totalorder %s18, 1
      %p62 = por %p60, %p61
      %p64 = scmp.ne.s32.totalorder %s49, %s63
      %p65 = scmp.eq.s32.totalorder %s18, 0
      %p66 = por %p64, %p65
      %s68 = sadd.s32 %s67, 1
      %p71 = scmp.eq.s32.totalorder %s12, 1
      %p72 = scmp.ne.s32.totalorder %s67, %s69
      %p73 = scmp.eq.s32.totalorder %s12, 0
      %p74 = por %p72, %p73
      %p75 = scmp.ne.s32.totalorder %s67, %s69
      %p76 = scmp.eq.s32.totalorder %s17, 1
      %p77 = por %p75, %p76
      %p78 = scmp.ne.s32.totalorder %s69, %s70
      %p79 = scmp.eq.s32.totalorder %s17, 0
      %p80 = por %p78, %p79
      %p81 = scmp.ne.s32.totalorder %s69, %s70
      %p82 = scmp.eq.s32.totalorder %s18, 1
      %p83 = por %p81, %p82
      %p85 = scmp.ne.s32.totalorder %s70, %s84
      %p86 = scmp.eq.s32.totalorder %s18, 0
      %p87 = por %p85, %p86
      %s88 = ssub.s32 %s12, %s19
      %p89 = scmp.eq.s32.totalorder %s88, 0
      %s91 = sadd.s32 %s90, 1
      %s92 = scalar_select %p89, %s90, %s91
      %p95 = pneg %p89
      %p96 = scmp.eq.s32.totalorder %s12, 1
      %p97 = por %p95, %p96
      %p98 = scmp.ne.s32.totalorder %s90, %s93
      %p99 = scmp.eq.s32.totalorder %s12, 0
      %p100 = por %p98, %p99
      %p101 = scmp.ne.s32.totalorder %s90, %s93
      %p102 = scmp.eq.s32.totalorder %s17, 1
      %p103 = por %p101, %p102
      %p104 = scmp.ne.s32.totalorder %s93, %s94
      %p105 = scmp.eq.s32.totalorder %s17, 0
      %p106 = por %p104, %p105
      %p107 = scmp.ne.s32.totalorder %s93, %s94
      %p108 = scmp.eq.s32.totalorder %s18, 1
      %p109 = por %p107, %p108
      %p111 = scmp.ne.s32.totalorder %s94, %s110
      %p112 = scmp.eq.s32.totalorder %s18, 0
      %p113 = por %p111, %p112
      %p114 = scmp.le.s32.totalorder 1, %s12
      %p115 = scmp.lt.s32.totalorder %s12, 3
      %p116 = pnand %p114, %p115
      %p117 = pneg %p116
      // Predicated region
      $region9: #{tpu_custom_call.1} parent=5 // pred_check
        _
      $region10: #{tpu_custom_call.1} parent=5 // pred_check_branch
        %119 = sbr.rel (%p116) target = $region12
      $region11: #{tpu_custom_call.1} parent=5 // pred_region
        %s120 = ssub.s32 %s12, 1
        // Predicated region
        $region13: #{tpu_custom_call.1} parent=11 // pred_check
          %p121 = pneg %p59
        $region14: #{tpu_custom_call.1} parent=11 // pred_check_branch
          %123 = sbr.rel (%p121) target = $region16
        $region15: #{tpu_custom_call.1} parent=11 // pred_region
          _
        $region16: #{tpu_custom_call.1} parent=11 // pred_fallthru
          _
        // Predicated region
        $region17: #{tpu_custom_call.1} parent=11 // pred_check
          %p124 = pneg %p80
        $region18: #{tpu_custom_call.1} parent=11 // pred_check_branch
          %126 = sbr.rel (%p124) target = $region20
        $region19: #{tpu_custom_call.1} parent=11 // pred_region
          _
        $region20: #{tpu_custom_call.1} parent=11 // pred_fallthru
          _
      $region12: #{tpu_custom_call.1} parent=5 // pred_fallthru
        _
      %p127 = scmp.lt.s32.totalorder %s12, 2
      // Predicated region
      $region21: #{tpu_custom_call.1} parent=5 // pred_check
        %p128 = pneg %p127
      $region22: #{tpu_custom_call.1} parent=5 // pred_check_branch
        %130 = sbr.rel (%p128) target = $region24
      $region23: #{tpu_custom_call.1} parent=5 // pred_region
        // Predicated region
        $region25: #{tpu_custom_call.1} parent=23 // pred_check
          %p131 = pneg %p32
        $region26: #{tpu_custom_call.1} parent=23 // pred_check_branch
          %133 = sbr.rel (%p131) target = $region28
        $region27: #{tpu_custom_call.1} parent=23 // pred_region
          %p134 = scmp.lt.s32.totalorder %s12, 1
          %s135 = scalar_select %p134, %s12, 1
          %s136 = smul.addr %s135, 54
          %s137 = smul.addr %s136, 8
          %s138 = scalar_lea.vmem %s0, %s137
        $region28: #{tpu_custom_call.1} parent=23 // pred_fallthru
          _
      $region24: #{tpu_custom_call.1} parent=5 // pred_fallthru
        _
      %p139 = scmp.le.s32.totalorder 1, %s12
      %p140 = scmp.lt.s32.totalorder %s12, 3
      %p141 = pnand %p139, %p140
      %p142 = pneg %p141
      // Predicated region
      $region29: #{tpu_custom_call.1} parent=5 // pred_check
        _
      $region30: #{tpu_custom_call.1} parent=5 // pred_check_branch
        %144 = sbr.rel (%p141) target = $region32
      $region31: #{tpu_custom_call.1} parent=5 // pred_region
        %s145 = ssub.s32 %s12, 1
        %p146 = scmp.lt.s32.totalorder %s17, 1
        %s147 = scalar_select %p146, %s17, 1
        %s148 = smul.addr %s147, 54
        %s149 = smul.addr %s148, 8
        %s150 = scalar_lea.vmem %s0, %s149
        %p151 = pneg %p38
        %p152 = pneg %p35
        %p153 = pneg %p59
        %p154 = pneg %p56
        %p155 = pneg %p80
        %p156 = pneg %p77
        %p157 = pneg %p106
        %p158 = pneg %p103
        %s159 = sand.u32 %s93, 1
        %s160 = scalar_lea.sflag [#allocation3], %s159
        %s161 = sand.u32 %s93, 1
        %s162 = smul.addr %s161, 16
        %s163 = scalar_lea.vmem [#allocation2], %s162
        %p164 = scmp.lt.s32.totalorder %s17, 1
        %s165 = scalar_select %p164, %s17, 1
        %s166 = smul.addr %s165, 54
        %s167 = smul.addr %s166, 8
        %s168 = scalar_lea.vmem %s0, %s167
        %v169 = vld [vmem:[%s168] sm:$0xff]
        %v170 = vld [vmem:[%s168 + $0x8] sm:$0xff]
        %v171 = vld [vmem:[%s168 + $0x10] sm:$0x3]
        %v172 = vld [vmem:[%s168 + $0x18] sm:$0xff]
        %v173 = vld [vmem:[%s168 + $0x20] sm:$0xff]
        %v174 = vld [vmem:[%s168 + $0x28] sm:$0x3]
        %v175 = vld [vmem:[%s168 + $0x30] sm:$0xff]
        %v176 = vld [vmem:[%s168 + $0x38] sm:$0xff]
        %v177 = vld [vmem:[%s168 + $0x40] sm:$0x3]
        %v178 = vld [vmem:[%s168 + $0x48] sm:$0xff]
        %v179 = vld [vmem:[%s168 + $0x50] sm:$0xff]
        %v180 = vld [vmem:[%s168 + $0x58] sm:$0x3]
        %v181 = vld [vmem:[%s168 + $0x60] sm:$0xff]
        %v182 = vld [vmem:[%s168 + $0x68] sm:$0xff]
        %v183 = vld [vmem:[%s168 + $0x70] sm:$0x3]
        %v184 = vld [vmem:[%s168 + $0x78] sm:$0xff]
        %v185 = vld [vmem:[%s168 + $0x80] sm:$0xff]
        %v186 = vld [vmem:[%s168 + $0x88] sm:$0x3]
        %v187 = vld [vmem:[%s168 + $0x90] sm:$0xff]
        %v188 = vld [vmem:[%s168 + $0x98] sm:$0xff]
        %v189 = vld [vmem:[%s168 + $0xa0] sm:$0x3]
        %v190 = vld [vmem:[%s168 + $0xa8] sm:$0xff]
        %v191 = vld [vmem:[%s168 + $0xb0] sm:$0xff]
        %v192 = vld [vmem:[%s168 + $0xb8] sm:$0x3]
        %v193 = vld [vmem:[%s168 + $0xc0] sm:$0xff]
        %v194 = vld [vmem:[%s168 + $0xc8] sm:$0xff]
        %v195 = vld [vmem:[%s168 + $0xd0] sm:$0x3]
        %v196 = vld [vmem:[%s168 + $0xd8] sm:$0xff]
        %v197 = vld [vmem:[%s168 + $0xe0] sm:$0xff]
        %v198 = vld [vmem:[%s168 + $0xe8] sm:$0x3]
        %v199 = vld [vmem:[%s168 + $0xf0] sm:$0xff]
        %v200 = vld [vmem:[%s168 + $0xf8] sm:$0xff]
        %v201 = vld [vmem:[%s168 + $0x100] sm:$0x3]
        %v202 = vld [vmem:[%s168 + $0x108] sm:$0xff]
        %v203 = vld [vmem:[%s168 + $0x110] sm:$0xff]
        %v204 = vld [vmem:[%s168 + $0x118] sm:$0x3]
        %v205 = vld [vmem:[%s168 + $0x120] sm:$0xff]
        %v206 = vld [vmem:[%s168 + $0x128] sm:$0xff]
        %v207 = vld [vmem:[%s168 + $0x130] sm:$0x3]
        %v208 = vld [vmem:[%s168 + $0x138] sm:$0xff]
        %v209 = vld [vmem:[%s168 + $0x140] sm:$0xff]
        %v210 = vld [vmem:[%s168 + $0x148] sm:$0x3]
        %v211 = vld [vmem:[%s168 + $0x150] sm:$0xff]
        %v212 = vld [vmem:[%s168 + $0x158] sm:$0xff]
        %v213 = vld [vmem:[%s168 + $0x160] sm:$0x3]
        %v214 = vld [vmem:[%s168 + $0x168] sm:$0xff]
        %v215 = vld [vmem:[%s168 + $0x170] sm:$0xff]
        %v216 = vld [vmem:[%s168 + $0x178] sm:$0x3]
        %v217 = vld [vmem:[%s168 + $0x180] sm:$0xff]
        %v218 = vld [vmem:[%s168 + $0x188] sm:$0xff]
        %v219 = vld [vmem:[%s168 + $0x190] sm:$0x3]
        %v220 = vld [vmem:[%s168 + $0x198] sm:$0xff]
        %v221 = vld [vmem:[%s168 + $0x1a0] sm:$0xff]
        %v222 = vld [vmem:[%s168 + $0x1a8] sm:$0x3]
        %vm271 = vcmask 1046528
        %v272 = vrot.slane %v169, 1
        %v273 = vrot.slane %v170, 1
        %v274 = vsel %vm271, %v272, %v273
        %v275 = vrot.slane %v171, 1
        %v276 = vsel %vm271, %v273, %v275
        %v277 = vrot.slane %v172, 1
        %v278 = vrot.slane %v173, 1
        %v279 = vsel %vm271, %v277, %v278
        %v280 = vrot.slane %v174, 1
        %v281 = vsel %vm271, %v278, %v280
        %v282 = vrot.slane %v175, 1
        %v283 = vrot.slane %v176, 1
        %v284 = vsel %vm271, %v282, %v283
        %v285 = vrot.slane %v177, 1
        %v286 = vsel %vm271, %v283, %v285
        %v287 = vrot.slane %v178, 1
        %v288 = vrot.slane %v179, 1
        %v289 = vsel %vm271, %v287, %v288
        %v290 = vrot.slane %v180, 1
        %v291 = vsel %vm271, %v288, %v290
        %v292 = vrot.slane %v181, 1
        %v293 = vrot.slane %v182, 1
        %v294 = vsel %vm271, %v292, %v293
        %v295 = vrot.slane %v183, 1
        %v296 = vsel %vm271, %v293, %v295
        %v297 = vrot.slane %v184, 1
        %v298 = vrot.slane %v185, 1
        %v299 = vsel %vm271, %v297, %v298
        %v300 = vrot.slane %v186, 1
        %v301 = vsel %vm271, %v298, %v300
        %v302 = vrot.slane %v187, 1
        %v303 = vrot.slane %v188, 1
        %v304 = vsel %vm271, %v302, %v303
        %v305 = vrot.slane %v189, 1
        %v306 = vsel %vm271, %v303, %v305
        %v307 = vrot.slane %v190, 1
        %v308 = vrot.slane %v191, 1
        %v309 = vsel %vm271, %v307, %v308
        %v310 = vrot.slane %v192, 1
        %v311 = vsel %vm271, %v308, %v310
        %v312 = vrot.slane %v193, 1
        %v313 = vrot.slane %v194, 1
        %v314 = vsel %vm271, %v312, %v313
        %v315 = vrot.slane %v195, 1
        %v316 = vsel %vm271, %v313, %v315
        %v317 = vrot.slane %v196, 1
        %v318 = vrot.slane %v197, 1
        %v319 = vsel %vm271, %v317, %v318
        %v320 = vrot.slane %v198, 1
        %v321 = vsel %vm271, %v318, %v320
        %v322 = vrot.slane %v199, 1
        %v323 = vrot.slane %v200, 1
        %v324 = vsel %vm271, %v322, %v323
        %v325 = vrot.slane %v201, 1
        %v326 = vsel %vm271, %v323, %v325
        %v327 = vrot.slane %v202, 1
        %v328 = vrot.slane %v203, 1
        %v329 = vsel %vm271, %v327, %v328
        %v330 = vrot.slane %v204, 1
        %v331 = vsel %vm271, %v328, %v330
        %v332 = vrot.slane %v205, 1
        %v333 = vrot.slane %v206, 1
        %v334 = vsel %vm271, %v332, %v333
        %v335 = vrot.slane %v207, 1
        %v336 = vsel %vm271, %v333, %v335
        %v337 = vrot.slane %v208, 1
        %v338 = vrot.slane %v209, 1
        %v339 = vsel %vm271, %v337, %v338
        %v340 = vrot.slane %v210, 1
        %v341 = vsel %vm271, %v338, %v340
        %v342 = vrot.slane %v211, 1
        %v343 = vrot.slane %v212, 1
        %v344 = vsel %vm271, %v342, %v343
        %v345 = vrot.slane %v213, 1
        %v346 = vsel %vm271, %v343, %v345
        %v347 = vrot.slane %v214, 1
        %v348 = vrot.slane %v215, 1
        %v349 = vsel %vm271, %v347, %v348
        %v350 = vrot.slane %v216, 1
        %v351 = vsel %vm271, %v348, %v350
        %vm352 = vcmask 1045504
        %v353 = vrot.slane %v169, 2
        %v354 = vrot.slane %v170, 2
        %v355 = vsel %vm352, %v353, %v354
        %v356 = vrot.slane %v171, 2
        %v357 = vsel %vm352, %v354, %v356
        %v358 = vrot.slane %v172, 2
        %v359 = vrot.slane %v173, 2
        %v360 = vsel %vm352, %v358, %v359
        %v361 = vrot.slane %v174, 2
        %v362 = vsel %vm352, %v359, %v361
        %v363 = vrot.slane %v175, 2
        %v364 = vrot.slane %v176, 2
        %v365 = vsel %vm352, %v363, %v364
        %v366 = vrot.slane %v177, 2
        %v367 = vsel %vm352, %v364, %v366
        %v368 = vrot.slane %v178, 2
        %v369 = vrot.slane %v179, 2
        %v370 = vsel %vm352, %v368, %v369
        %v371 = vrot.slane %v180, 2
        %v372 = vsel %vm352, %v369, %v371
        %v373 = vrot.slane %v181, 2
        %v374 = vrot.slane %v182, 2
        %v375 = vsel %vm352, %v373, %v374
        %v376 = vrot.slane %v183, 2
        %v377 = vsel %vm352, %v374, %v376
        %v378 = vrot.slane %v184, 2
        %v379 = vrot.slane %v185, 2
        %v380 = vsel %vm352, %v378, %v379
        %v381 = vrot.slane %v186, 2
        %v382 = vsel %vm352, %v379, %v381
        %v383 = vrot.slane %v187, 2
        %v384 = vrot.slane %v188, 2
        %v385 = vsel %vm352, %v383, %v384
        %v386 = vrot.slane %v189, 2
        %v387 = vsel %vm352, %v384, %v386
        %v388 = vrot.slane %v190, 2
        %v389 = vrot.slane %v191, 2
        %v390 = vsel %vm352, %v388, %v389
        %v391 = vrot.slane %v192, 2
        %v392 = vsel %vm352, %v389, %v391
        %v393 = vrot.slane %v193, 2
        %v394 = vrot.slane %v194, 2
        %v395 = vsel %vm352, %v393, %v394
        %v396 = vrot.slane %v195, 2
        %v397 = vsel %vm352, %v394, %v396
        %v398 = vrot.slane %v196, 2
        %v399 = vrot.slane %v197, 2
        %v400 = vsel %vm352, %v398, %v399
        %v401 = vrot.slane %v198, 2
        %v402 = vsel %vm352, %v399, %v401
        %v403 = vrot.slane %v199, 2
        %v404 = vrot.slane %v200, 2
        %v405 = vsel %vm352, %v403, %v404
        %v406 = vrot.slane %v201, 2
        %v407 = vsel %vm352, %v404, %v406
        %v408 = vrot.slane %v202, 2
        %v409 = vrot.slane %v203, 2
        %v410 = vsel %vm352, %v408, %v409
        %v411 = vrot.slane %v204, 2
        %v412 = vsel %vm352, %v409, %v411
        %v413 = vrot.slane %v205, 2
        %v414 = vrot.slane %v206, 2
        %v415 = vsel %vm352, %v413, %v414
        %v416 = vrot.slane %v207, 2
        %v417 = vsel %vm352, %v414, %v416
        %v418 = vrot.slane %v208, 2
        %v419 = vrot.slane %v209, 2
        %v420 = vsel %vm352, %v418, %v419
        %v421 = vrot.slane %v210, 2
        %v422 = vsel %vm352, %v419, %v421
        %v423 = vrot.slane %v211, 2
        %v424 = vrot.slane %v212, 2
        %v425 = vsel %vm352, %v423, %v424
        %v426 = vrot.slane %v213, 2
        %v427 = vsel %vm352, %v424, %v426
        %v428 = vrot.slane %v214, 2
        %v429 = vrot.slane %v215, 2
        %v430 = vsel %vm352, %v428, %v429
        %v431 = vrot.slane %v216, 2
        %v432 = vsel %vm352, %v429, %v431
        %v436 = vrot.slane %v217, 1
        %v437 = vrot.slane %v218, 1
        %v438 = vsel %vm271, %v436, %v437
        %v439 = vrot.slane %v219, 1
        %v440 = vsel %vm271, %v437, %v439
        %v441 = vrot.slane %v217, 2
        %v442 = vrot.slane %v218, 2
        %v443 = vsel %vm352, %v441, %v442
        %v444 = vrot.slane %v219, 2
        %v445 = vsel %vm352, %v442, %v444
        %v449 = vrot.slane %v220, 1
        %v450 = vrot.slane %v221, 1
        %v451 = vsel %vm271, %v449, %v450
        %v452 = vrot.slane %v222, 1
        %v453 = vsel %vm271, %v450, %v452
        %v454 = vrot.slane %v220, 2
        %v455 = vrot.slane %v221, 2
        %v456 = vsel %vm352, %v454, %v455
        %v457 = vrot.slane %v222, 2
        %v458 = vsel %vm352, %v455, %v457
        %459 = vrot.lane.b32.xlu0 %v274, 4
        %v460 = vpop.permute.xlu0 %459
        %461 = vrot.lane.b32.xlu0 %v276, 4
        %v462 = vpop.permute.xlu0 %461
        %463 = vrot.lane.b32.xlu0 %v279, 4
        %v464 = vpop.permute.xlu0 %463
        %465 = vrot.lane.b32.xlu0 %v281, 4
        %v466 = vpop.permute.xlu0 %465
        %467 = vrot.lane.b32.xlu0 %v284, 4
        %v468 = vpop.permute.xlu0 %467
        %469 = vrot.lane.b32.xlu0 %v286, 4
        %v470 = vpop.permute.xlu0 %469
        %471 = vrot.lane.b32.xlu0 %v289, 4
        %v472 = vpop.permute.xlu0 %471
        %473 = vrot.lane.b32.xlu0 %v291, 4
        %v474 = vpop.permute.xlu0 %473
        %475 = vrot.lane.b32.xlu0 %v294, 4
        %v476 = vpop.permute.xlu0 %475
        %477 = vrot.lane.b32.xlu0 %v296, 4
        %v478 = vpop.permute.xlu0 %477
        %479 = vrot.lane.b32.xlu0 %v299, 4
        %v480 = vpop.permute.xlu0 %479
        %481 = vrot.lane.b32.xlu0 %v301, 4
        %v482 = vpop.permute.xlu0 %481
        %483 = vrot.lane.b32.xlu0 %v304, 4
        %v484 = vpop.permute.xlu0 %483
        %485 = vrot.lane.b32.xlu0 %v306, 4
        %v486 = vpop.permute.xlu0 %485
        %487 = vrot.lane.b32.xlu0 %v309, 4
        %v488 = vpop.permute.xlu0 %487
        %489 = vrot.lane.b32.xlu0 %v311, 4
        %v490 = vpop.permute.xlu0 %489
        %491 = vrot.lane.b32.xlu0 %v314, 4
        %v492 = vpop.permute.xlu0 %491
        %493 = vrot.lane.b32.xlu0 %v316, 4
        %v494 = vpop.permute.xlu0 %493
        %495 = vrot.lane.b32.xlu0 %v319, 4
        %v496 = vpop.permute.xlu0 %495
        %497 = vrot.lane.b32.xlu0 %v321, 4
        %v498 = vpop.permute.xlu0 %497
        %499 = vrot.lane.b32.xlu0 %v324, 4
        %v500 = vpop.permute.xlu0 %499
        %501 = vrot.lane.b32.xlu0 %v326, 4
        %v502 = vpop.permute.xlu0 %501
        %503 = vrot.lane.b32.xlu0 %v329, 4
        %v504 = vpop.permute.xlu0 %503
        %505 = vrot.lane.b32.xlu0 %v331, 4
        %v506 = vpop.permute.xlu0 %505
        %507 = vrot.lane.b32.xlu0 %v334, 4
        %v508 = vpop.permute.xlu0 %507
        %509 = vrot.lane.b32.xlu0 %v336, 4
        %v510 = vpop.permute.xlu0 %509
        %511 = vrot.lane.b32.xlu0 %v339, 4
        %v512 = vpop.permute.xlu0 %511
        %513 = vrot.lane.b32.xlu0 %v341, 4
        %v514 = vpop.permute.xlu0 %513
        %515 = vrot.lane.b32.xlu0 %v344, 4
        %v516 = vpop.permute.xlu0 %515
        %517 = vrot.lane.b32.xlu0 %v346, 4
        %v518 = vpop.permute.xlu0 %517
        %519 = vrot.lane.b32.xlu0 %v349, 4
        %v520 = vpop.permute.xlu0 %519
        %521 = vrot.lane.b32.xlu0 %v351, 4
        %v522 = vpop.permute.xlu0 %521
        %555 = vrot.lane.b32.xlu0 %v355, 8
        %v556 = vpop.permute.xlu0 %555
        %557 = vrot.lane.b32.xlu0 %v357, 8
        %v558 = vpop.permute.xlu0 %557
        %559 = vrot.lane.b32.xlu0 %v360, 8
        %v560 = vpop.permute.xlu0 %559
        %561 = vrot.lane.b32.xlu0 %v362, 8
        %v562 = vpop.permute.xlu0 %561
        %563 = vrot.lane.b32.xlu0 %v365, 8
        %v564 = vpop.permute.xlu0 %563
        %565 = vrot.lane.b32.xlu0 %v367, 8
        %v566 = vpop.permute.xlu0 %565
        %567 = vrot.lane.b32.xlu0 %v370, 8
        %v568 = vpop.permute.xlu0 %567
        %569 = vrot.lane.b32.xlu0 %v372, 8
        %v570 = vpop.permute.xlu0 %569
        %571 = vrot.lane.b32.xlu0 %v375, 8
        %v572 = vpop.permute.xlu0 %571
        %573 = vrot.lane.b32.xlu0 %v377, 8
        %v574 = vpop.permute.xlu0 %573
        %575 = vrot.lane.b32.xlu0 %v380, 8
        %v576 = vpop.permute.xlu0 %575
        %577 = vrot.lane.b32.xlu0 %v382, 8
        %v578 = vpop.permute.xlu0 %577
        %579 = vrot.lane.b32.xlu0 %v385, 8
        %v580 = vpop.permute.xlu0 %579
        %581 = vrot.lane.b32.xlu0 %v387, 8
        %v582 = vpop.permute.xlu0 %581
        %583 = vrot.lane.b32.xlu0 %v390, 8
        %v584 = vpop.permute.xlu0 %583
        %585 = vrot.lane.b32.xlu0 %v392, 8
        %v586 = vpop.permute.xlu0 %585
        %587 = vrot.lane.b32.xlu0 %v395, 8
        %v588 = vpop.permute.xlu0 %587
        %589 = vrot.lane.b32.xlu0 %v397, 8
        %v590 = vpop.permute.xlu0 %589
        %591 = vrot.lane.b32.xlu0 %v400, 8
        %v592 = vpop.permute.xlu0 %591
        %593 = vrot.lane.b32.xlu0 %v402, 8
        %v594 = vpop.permute.xlu0 %593
        %595 = vrot.lane.b32.xlu0 %v405, 8
        %v596 = vpop.permute.xlu0 %595
        %597 = vrot.lane.b32.xlu0 %v407, 8
        %v598 = vpop.permute.xlu0 %597
        %599 = vrot.lane.b32.xlu0 %v410, 8
        %v600 = vpop.permute.xlu0 %599
        %601 = vrot.lane.b32.xlu0 %v412, 8
        %v602 = vpop.permute.xlu0 %601
        %603 = vrot.lane.b32.xlu0 %v415, 8
        %v604 = vpop.permute.xlu0 %603
        %605 = vrot.lane.b32.xlu0 %v417, 8
        %v606 = vpop.permute.xlu0 %605
        %607 = vrot.lane.b32.xlu0 %v420, 8
        %v608 = vpop.permute.xlu0 %607
        %609 = vrot.lane.b32.xlu0 %v422, 8
        %v610 = vpop.permute.xlu0 %609
        %611 = vrot.lane.b32.xlu0 %v425, 8
        %v612 = vpop.permute.xlu0 %611
        %613 = vrot.lane.b32.xlu0 %v427, 8
        %v614 = vpop.permute.xlu0 %613
        %615 = vrot.lane.b32.xlu0 %v430, 8
        %v616 = vpop.permute.xlu0 %615
        %617 = vrot.lane.b32.xlu0 %v432, 8
        %v618 = vpop.permute.xlu0 %617
        %651 = vrot.lane.b32.xlu0 %v172, 12
        %v652 = vpop.permute.xlu0 %651
        %653 = vrot.lane.b32.xlu0 %v173, 12
        %v654 = vpop.permute.xlu0 %653
        %655 = vrot.lane.b32.xlu0 %v175, 12
        %v656 = vpop.permute.xlu0 %655
        %657 = vrot.lane.b32.xlu0 %v176, 12
        %v658 = vpop.permute.xlu0 %657
        %659 = vrot.lane.b32.xlu0 %v178, 12
        %v660 = vpop.permute.xlu0 %659
        %661 = vrot.lane.b32.xlu0 %v179, 12
        %v662 = vpop.permute.xlu0 %661
        %663 = vrot.lane.b32.xlu0 %v181, 12
        %v664 = vpop.permute.xlu0 %663
        %665 = vrot.lane.b32.xlu0 %v182, 12
        %v666 = vpop.permute.xlu0 %665
        %667 = vrot.lane.b32.xlu0 %v184, 12
        %v668 = vpop.permute.xlu0 %667
        %669 = vrot.lane.b32.xlu0 %v185, 12
        %v670 = vpop.permute.xlu0 %669
        %671 = vrot.lane.b32.xlu0 %v187, 12
        %v672 = vpop.permute.xlu0 %671
        %673 = vrot.lane.b32.xlu0 %v188, 12
        %v674 = vpop.permute.xlu0 %673
        %675 = vrot.lane.b32.xlu0 %v190, 12
        %v676 = vpop.permute.xlu0 %675
        %677 = vrot.lane.b32.xlu0 %v191, 12
        %v678 = vpop.permute.xlu0 %677
        %679 = vrot.lane.b32.xlu0 %v193, 12
        %v680 = vpop.permute.xlu0 %679
        %681 = vrot.lane.b32.xlu0 %v194, 12
        %v682 = vpop.permute.xlu0 %681
        %683 = vrot.lane.b32.xlu0 %v196, 12
        %v684 = vpop.permute.xlu0 %683
        %685 = vrot.lane.b32.xlu0 %v197, 12
        %v686 = vpop.permute.xlu0 %685
        %687 = vrot.lane.b32.xlu0 %v199, 12
        %v688 = vpop.permute.xlu0 %687
        %689 = vrot.lane.b32.xlu0 %v200, 12
        %v690 = vpop.permute.xlu0 %689
        %691 = vrot.lane.b32.xlu0 %v202, 12
        %v692 = vpop.permute.xlu0 %691
        %693 = vrot.lane.b32.xlu0 %v203, 12
        %v694 = vpop.permute.xlu0 %693
        %695 = vrot.lane.b32.xlu0 %v205, 12
        %v696 = vpop.permute.xlu0 %695
        %697 = vrot.lane.b32.xlu0 %v206, 12
        %v698 = vpop.permute.xlu0 %697
        %699 = vrot.lane.b32.xlu0 %v208, 12
        %v700 = vpop.permute.xlu0 %699
        %701 = vrot.lane.b32.xlu0 %v209, 12
        %v702 = vpop.permute.xlu0 %701
        %703 = vrot.lane.b32.xlu0 %v211, 12
        %v704 = vpop.permute.xlu0 %703
        %705 = vrot.lane.b32.xlu0 %v212, 12
        %v706 = vpop.permute.xlu0 %705
        %707 = vrot.lane.b32.xlu0 %v214, 12
        %v708 = vpop.permute.xlu0 %707
        %709 = vrot.lane.b32.xlu0 %v215, 12
        %v710 = vpop.permute.xlu0 %709
        %711 = vrot.lane.b32.xlu0 %v217, 12
        %v712 = vpop.permute.xlu0 %711
        %713 = vrot.lane.b32.xlu0 %v218, 12
        %v714 = vpop.permute.xlu0 %713
        %747 = vrot.lane.b32.xlu0 %v279, 16
        %v748 = vpop.permute.xlu0 %747
        %749 = vrot.lane.b32.xlu0 %v281, 16
        %v750 = vpop.permute.xlu0 %749
        %751 = vrot.lane.b32.xlu0 %v284, 16
        %v752 = vpop.permute.xlu0 %751
        %753 = vrot.lane.b32.xlu0 %v286, 16
        %v754 = vpop.permute.xlu0 %753
        %755 = vrot.lane.b32.xlu0 %v289, 16
        %v756 = vpop.permute.xlu0 %755
        %757 = vrot.lane.b32.xlu0 %v291, 16
        %v758 = vpop.permute.xlu0 %757
        %759 = vrot.lane.b32.xlu0 %v294, 16
        %v760 = vpop.permute.xlu0 %759
        %761 = vrot.lane.b32.xlu0 %v296, 16
        %v762 = vpop.permute.xlu0 %761
        %763 = vrot.lane.b32.xlu0 %v299, 16
        %v764 = vpop.permute.xlu0 %763
        %765 = vrot.lane.b32.xlu0 %v301, 16
        %v766 = vpop.permute.xlu0 %765
        %767 = vrot.lane.b32.xlu0 %v304, 16
        %v768 = vpop.permute.xlu0 %767
        %769 = vrot.lane.b32.xlu0 %v306, 16
        %v770 = vpop.permute.xlu0 %769
        %771 = vrot.lane.b32.xlu0 %v309, 16
        %v772 = vpop.permute.xlu0 %771
        %773 = vrot.lane.b32.xlu0 %v311, 16
        %v774 = vpop.permute.xlu0 %773
        %775 = vrot.lane.b32.xlu0 %v314, 16
        %v776 = vpop.permute.xlu0 %775
        %777 = vrot.lane.b32.xlu0 %v316, 16
        %v778 = vpop.permute.xlu0 %777
        %779 = vrot.lane.b32.xlu0 %v319, 16
        %v780 = vpop.permute.xlu0 %779
        %781 = vrot.lane.b32.xlu0 %v321, 16
        %v782 = vpop.permute.xlu0 %781
        %783 = vrot.lane.b32.xlu0 %v324, 16
        %v784 = vpop.permute.xlu0 %783
        %785 = vrot.lane.b32.xlu0 %v326, 16
        %v786 = vpop.permute.xlu0 %785
        %787 = vrot.lane.b32.xlu0 %v329, 16
        %v788 = vpop.permute.xlu0 %787
        %789 = vrot.lane.b32.xlu0 %v331, 16
        %v790 = vpop.permute.xlu0 %789
        %791 = vrot.lane.b32.xlu0 %v334, 16
        %v792 = vpop.permute.xlu0 %791
        %793 = vrot.lane.b32.xlu0 %v336, 16
        %v794 = vpop.permute.xlu0 %793
        %795 = vrot.lane.b32.xlu0 %v339, 16
        %v796 = vpop.permute.xlu0 %795
        %797 = vrot.lane.b32.xlu0 %v341, 16
        %v798 = vpop.permute.xlu0 %797
        %799 = vrot.lane.b32.xlu0 %v344, 16
        %v800 = vpop.permute.xlu0 %799
        %801 = vrot.lane.b32.xlu0 %v346, 16
        %v802 = vpop.permute.xlu0 %801
        %803 = vrot.lane.b32.xlu0 %v349, 16
        %v804 = vpop.permute.xlu0 %803
        %805 = vrot.lane.b32.xlu0 %v351, 16
        %v806 = vpop.permute.xlu0 %805
        %807 = vrot.lane.b32.xlu0 %v438, 16
        %v808 = vpop.permute.xlu0 %807
        %809 = vrot.lane.b32.xlu0 %v440, 16
        %v810 = vpop.permute.xlu0 %809
        %843 = vrot.lane.b32.xlu0 %v360, 20
        %v844 = vpop.permute.xlu0 %843
        %845 = vrot.lane.b32.xlu0 %v362, 20
        %v846 = vpop.permute.xlu0 %845
        %847 = vrot.lane.b32.xlu0 %v365, 20
        %v848 = vpop.permute.xlu0 %847
        %849 = vrot.lane.b32.xlu0 %v367, 20
        %v850 = vpop.permute.xlu0 %849
        %851 = vrot.lane.b32.xlu0 %v370, 20
        %v852 = vpop.permute.xlu0 %851
        %853 = vrot.lane.b32.xlu0 %v372, 20
        %v854 = vpop.permute.xlu0 %853
        %855 = vrot.lane.b32.xlu0 %v375, 20
        %v856 = vpop.permute.xlu0 %855
        %857 = vrot.lane.b32.xlu0 %v377, 20
        %v858 = vpop.permute.xlu0 %857
        %859 = vrot.lane.b32.xlu0 %v380, 20
        %v860 = vpop.permute.xlu0 %859
        %861 = vrot.lane.b32.xlu0 %v382, 20
        %v862 = vpop.permute.xlu0 %861
        %863 = vrot.lane.b32.xlu0 %v385, 20
        %v864 = vpop.permute.xlu0 %863
        %865 = vrot.lane.b32.xlu0 %v387, 20
        %v866 = vpop.permute.xlu0 %865
        %867 = vrot.lane.b32.xlu0 %v390, 20
        %v868 = vpop.permute.xlu0 %867
        %869 = vrot.lane.b32.xlu0 %v392, 20
        %v870 = vpop.permute.xlu0 %869
        %871 = vrot.lane.b32.xlu0 %v395, 20
        %v872 = vpop.permute.xlu0 %871
        %873 = vrot.lane.b32.xlu0 %v397, 20
        %v874 = vpop.permute.xlu0 %873
        %875 = vrot.lane.b32.xlu0 %v400, 20
        %v876 = vpop.permute.xlu0 %875
        %877 = vrot.lane.b32.xlu0 %v402, 20
        %v878 = vpop.permute.xlu0 %877
        %879 = vrot.lane.b32.xlu0 %v405, 20
        %v880 = vpop.permute.xlu0 %879
        %881 = vrot.lane.b32.xlu0 %v407, 20
        %v882 = vpop.permute.xlu0 %881
        %883 = vrot.lane.b32.xlu0 %v410, 20
        %v884 = vpop.permute.xlu0 %883
        %885 = vrot.lane.b32.xlu0 %v412, 20
        %v886 = vpop.permute.xlu0 %885
        %887 = vrot.lane.b32.xlu0 %v415, 20
        %v888 = vpop.permute.xlu0 %887
        %889 = vrot.lane.b32.xlu0 %v417, 20
        %v890 = vpop.permute.xlu0 %889
        %891 = vrot.lane.b32.xlu0 %v420, 20
        %v892 = vpop.permute.xlu0 %891
        %893 = vrot.lane.b32.xlu0 %v422, 20
        %v894 = vpop.permute.xlu0 %893
        %895 = vrot.lane.b32.xlu0 %v425, 20
        %v896 = vpop.permute.xlu0 %895
        %897 = vrot.lane.b32.xlu0 %v427, 20
        %v898 = vpop.permute.xlu0 %897
        %899 = vrot.lane.b32.xlu0 %v430, 20
        %v900 = vpop.permute.xlu0 %899
        %901 = vrot.lane.b32.xlu0 %v432, 20
        %v902 = vpop.permute.xlu0 %901
        %903 = vrot.lane.b32.xlu0 %v443, 20
        %v904 = vpop.permute.xlu0 %903
        %905 = vrot.lane.b32.xlu0 %v445, 20
        %v906 = vpop.permute.xlu0 %905
        %939 = vrot.lane.b32.xlu0 %v175, 24
        %v940 = vpop.permute.xlu0 %939
        %941 = vrot.lane.b32.xlu0 %v176, 24
        %v942 = vpop.permute.xlu0 %941
        %943 = vrot.lane.b32.xlu0 %v178, 24
        %v944 = vpop.permute.xlu0 %943
        %945 = vrot.lane.b32.xlu0 %v179, 24
        %v946 = vpop.permute.xlu0 %945
        %947 = vrot.lane.b32.xlu0 %v181, 24
        %v948 = vpop.permute.xlu0 %947
        %949 = vrot.lane.b32.xlu0 %v182, 24
        %v950 = vpop.permute.xlu0 %949
        %951 = vrot.lane.b32.xlu0 %v184, 24
        %v952 = vpop.permute.xlu0 %951
        %953 = vrot.lane.b32.xlu0 %v185, 24
        %v954 = vpop.permute.xlu0 %953
        %955 = vrot.lane.b32.xlu0 %v187, 24
        %v956 = vpop.permute.xlu0 %955
        %957 = vrot.lane.b32.xlu0 %v188, 24
        %v958 = vpop.permute.xlu0 %957
        %959 = vrot.lane.b32.xlu0 %v190, 24
        %v960 = vpop.permute.xlu0 %959
        %961 = vrot.lane.b32.xlu0 %v191, 24
        %v962 = vpop.permute.xlu0 %961
        %963 = vrot.lane.b32.xlu0 %v193, 24
        %v964 = vpop.permute.xlu0 %963
        %965 = vrot.lane.b32.xlu0 %v194, 24
        %v966 = vpop.permute.xlu0 %965
        %967 = vrot.lane.b32.xlu0 %v196, 24
        %v968 = vpop.permute.xlu0 %967
        %969 = vrot.lane.b32.xlu0 %v197, 24
        %v970 = vpop.permute.xlu0 %969
        %971 = vrot.lane.b32.xlu0 %v199, 24
        %v972 = vpop.permute.xlu0 %971
        %973 = vrot.lane.b32.xlu0 %v200, 24
        %v974 = vpop.permute.xlu0 %973
        %975 = vrot.lane.b32.xlu0 %v202, 24
        %v976 = vpop.permute.xlu0 %975
        %977 = vrot.lane.b32.xlu0 %v203, 24
        %v978 = vpop.permute.xlu0 %977
        %979 = vrot.lane.b32.xlu0 %v205, 24
        %v980 = vpop.permute.xlu0 %979
        %981 = vrot.lane.b32.xlu0 %v206, 24
        %v982 = vpop.permute.xlu0 %981
        %983 = vrot.lane.b32.xlu0 %v208, 24
        %v984 = vpop.permute.xlu0 %983
        %985 = vrot.lane.b32.xlu0 %v209, 24
        %v986 = vpop.permute.xlu0 %985
        %987 = vrot.lane.b32.xlu0 %v211, 24
        %v988 = vpop.permute.xlu0 %987
        %989 = vrot.lane.b32.xlu0 %v212, 24
        %v990 = vpop.permute.xlu0 %989
        %991 = vrot.lane.b32.xlu0 %v214, 24
        %v992 = vpop.permute.xlu0 %991
        %993 = vrot.lane.b32.xlu0 %v215, 24
        %v994 = vpop.permute.xlu0 %993
        %995 = vrot.lane.b32.xlu0 %v217, 24
        %v996 = vpop.permute.xlu0 %995
        %997 = vrot.lane.b32.xlu0 %v218, 24
        %v998 = vpop.permute.xlu0 %997
        %999 = vrot.lane.b32.xlu0 %v220, 24
        %v1000 = vpop.permute.xlu0 %999
        %1001 = vrot.lane.b32.xlu0 %v221, 24
        %v1002 = vpop.permute.xlu0 %1001
        %1035 = vrot.lane.b32.xlu0 %v284, 28
        %v1036 = vpop.permute.xlu0 %1035
        %1037 = vrot.lane.b32.xlu0 %v286, 28
        %v1038 = vpop.permute.xlu0 %1037
        %1039 = vrot.lane.b32.xlu0 %v289, 28
        %v1040 = vpop.permute.xlu0 %1039
        %1041 = vrot.lane.b32.xlu0 %v291, 28
        %v1042 = vpop.permute.xlu0 %1041
        %1043 = vrot.lane.b32.xlu0 %v294, 28
        %v1044 = vpop.permute.xlu0 %1043
        %1045 = vrot.lane.b32.xlu0 %v296, 28
        %v1046 = vpop.permute.xlu0 %1045
        %1047 = vrot.lane.b32.xlu0 %v299, 28
        %v1048 = vpop.permute.xlu0 %1047
        %1049 = vrot.lane.b32.xlu0 %v301, 28
        %v1050 = vpop.permute.xlu0 %1049
        %1051 = vrot.lane.b32.xlu0 %v304, 28
        %v1052 = vpop.permute.xlu0 %1051
        %1053 = vrot.lane.b32.xlu0 %v306, 28
        %v1054 = vpop.permute.xlu0 %1053
        %1055 = vrot.lane.b32.xlu0 %v309, 28
        %v1056 = vpop.permute.xlu0 %1055
        %1057 = vrot.lane.b32.xlu0 %v311, 28
        %v1058 = vpop.permute.xlu0 %1057
        %1059 = vrot.lane.b32.xlu0 %v314, 28
        %v1060 = vpop.permute.xlu0 %1059
        %1061 = vrot.lane.b32.xlu0 %v316, 28
        %v1062 = vpop.permute.xlu0 %1061
        %1063 = vrot.lane.b32.xlu0 %v319, 28
        %v1064 = vpop.permute.xlu0 %1063
        %1065 = vrot.lane.b32.xlu0 %v321, 28
        %v1066 = vpop.permute.xlu0 %1065
        %1067 = vrot.lane.b32.xlu0 %v324, 28
        %v1068 = vpop.permute.xlu0 %1067
        %1069 = vrot.lane.b32.xlu0 %v326, 28
        %v1070 = vpop.permute.xlu0 %1069
        %1071 = vrot.lane.b32.xlu0 %v329, 28
        %v1072 = vpop.permute.xlu0 %1071
        %1073 = vrot.lane.b32.xlu0 %v331, 28
        %v1074 = vpop.permute.xlu0 %1073
        %1075 = vrot.lane.b32.xlu0 %v334, 28
        %v1076 = vpop.permute.xlu0 %1075
        %1077 = vrot.lane.b32.xlu0 %v336, 28
        %v1078 = vpop.permute.xlu0 %1077
        %1079 = vrot.lane.b32.xlu0 %v339, 28
        %v1080 = vpop.permute.xlu0 %1079
        %1081 = vrot.lane.b32.xlu0 %v341, 28
        %v1082 = vpop.permute.xlu0 %1081
        %1083 = vrot.lane.b32.xlu0 %v344, 28
        %v1084 = vpop.permute.xlu0 %1083
        %1085 = vrot.lane.b32.xlu0 %v346, 28
        %v1086 = vpop.permute.xlu0 %1085
        %1087 = vrot.lane.b32.xlu0 %v349, 28
        %v1088 = vpop.permute.xlu0 %1087
        %1089 = vrot.lane.b32.xlu0 %v351, 28
        %v1090 = vpop.permute.xlu0 %1089
        %1091 = vrot.lane.b32.xlu0 %v438, 28
        %v1092 = vpop.permute.xlu0 %1091
        %1093 = vrot.lane.b32.xlu0 %v440, 28
        %v1094 = vpop.permute.xlu0 %1093
        %1095 = vrot.lane.b32.xlu0 %v451, 28
        %v1096 = vpop.permute.xlu0 %1095
        %1097 = vrot.lane.b32.xlu0 %v453, 28
        %v1098 = vpop.permute.xlu0 %1097
        %1131 = vrot.lane.b32.xlu0 %v365, 32
        %v1132 = vpop.permute.xlu0 %1131
        %1133 = vrot.lane.b32.xlu0 %v367, 32
        %v1134 = vpop.permute.xlu0 %1133
        %1135 = vrot.lane.b32.xlu0 %v370, 32
        %v1136 = vpop.permute.xlu0 %1135
        %1137 = vrot.lane.b32.xlu0 %v372, 32
        %v1138 = vpop.permute.xlu0 %1137
        %1139 = vrot.lane.b32.xlu0 %v375, 32
        %v1140 = vpop.permute.xlu0 %1139
        %1141 = vrot.lane.b32.xlu0 %v377, 32
        %v1142 = vpop.permute.xlu0 %1141
        %1143 = vrot.lane.b32.xlu0 %v380, 32
        %v1144 = vpop.permute.xlu0 %1143
        %1145 = vrot.lane.b32.xlu0 %v382, 32
        %v1146 = vpop.permute.xlu0 %1145
        %1147 = vrot.lane.b32.xlu0 %v385, 32
        %v1148 = vpop.permute.xlu0 %1147
        %1149 = vrot.lane.b32.xlu0 %v387, 32
        %v1150 = vpop.permute.xlu0 %1149
        %1151 = vrot.lane.b32.xlu0 %v390, 32
        %v1152 = vpop.permute.xlu0 %1151
        %1153 = vrot.lane.b32.xlu0 %v392, 32
        %v1154 = vpop.permute.xlu0 %1153
        %1155 = vrot.lane.b32.xlu0 %v395, 32
        %v1156 = vpop.permute.xlu0 %1155
        %1157 = vrot.lane.b32.xlu0 %v397, 32
        %v1158 = vpop.permute.xlu0 %1157
        %1159 = vrot.lane.b32.xlu0 %v400, 32
        %v1160 = vpop.permute.xlu0 %1159
        %1161 = vrot.lane.b32.xlu0 %v402, 32
        %v1162 = vpop.permute.xlu0 %1161
        %1163 = vrot.lane.b32.xlu0 %v405, 32
        %v1164 = vpop.permute.xlu0 %1163
        %1165 = vrot.lane.b32.xlu0 %v407, 32
        %v1166 = vpop.permute.xlu0 %1165
        %1167 = vrot.lane.b32.xlu0 %v410, 32
        %v1168 = vpop.permute.xlu0 %1167
        %1169 = vrot.lane.b32.xlu0 %v412, 32
        %v1170 = vpop.permute.xlu0 %1169
        %1171 = vrot.lane.b32.xlu0 %v415, 32
        %v1172 = vpop.permute.xlu0 %1171
        %1173 = vrot.lane.b32.xlu0 %v417, 32
        %v1174 = vpop.permute.xlu0 %1173
        %1175 = vrot.lane.b32.xlu0 %v420, 32
        %v1176 = vpop.permute.xlu0 %1175
        %1177 = vrot.lane.b32.xlu0 %v422, 32
        %v1178 = vpop.permute.xlu0 %1177
        %1179 = vrot.lane.b32.xlu0 %v425, 32
        %v1180 = vpop.permute.xlu0 %1179
        %1181 = vrot.lane.b32.xlu0 %v427, 32
        %v1182 = vpop.permute.xlu0 %1181
        %1183 = vrot.lane.b32.xlu0 %v430, 32
        %v1184 = vpop.permute.xlu0 %1183
        %1185 = vrot.lane.b32.xlu0 %v432, 32
        %v1186 = vpop.permute.xlu0 %1185
        %1187 = vrot.lane.b32.xlu0 %v443, 32
        %v1188 = vpop.permute.xlu0 %1187
        %1189 = vrot.lane.b32.xlu0 %v445, 32
        %v1190 = vpop.permute.xlu0 %1189
        %1191 = vrot.lane.b32.xlu0 %v456, 32
        %v1192 = vpop.permute.xlu0 %1191
        %1193 = vrot.lane.b32.xlu0 %v458, 32
        %v1194 = vpop.permute.xlu0 %1193
        %vm1227 = vcmask 31744
        %v1228 = vsel %vm1227, %v169, %v460
        %v1229 = vsel %vm1227, %v170, %v462
        %v1230 = vsel %vm1227, %v172, %v464
        %v1231 = vsel %vm1227, %v173, %v466
        %v1232 = vsel %vm1227, %v175, %v468
        %v1233 = vsel %vm1227, %v176, %v470
        %v1234 = vsel %vm1227, %v178, %v472
        %v1235 = vsel %vm1227, %v179, %v474
        %v1236 = vsel %vm1227, %v181, %v476
        %v1237 = vsel %vm1227, %v182, %v478
        %v1238 = vsel %vm1227, %v184, %v480
        %v1239 = vsel %vm1227, %v185, %v482
        %v1240 = vsel %vm1227, %v187, %v484
        %v1241 = vsel %vm1227, %v188, %v486
        %v1242 = vsel %vm1227, %v190, %v488
        %v1243 = vsel %vm1227, %v191, %v490
        %v1244 = vsel %vm1227, %v193, %v492
        %v1245 = vsel %vm1227, %v194, %v494
        %v1246 = vsel %vm1227, %v196, %v496
        %v1247 = vsel %vm1227, %v197, %v498
        %v1248 = vsel %vm1227, %v199, %v500
        %v1249 = vsel %vm1227, %v200, %v502
        %v1250 = vsel %vm1227, %v202, %v504
        %v1251 = vsel %vm1227, %v203, %v506
        %v1252 = vsel %vm1227, %v205, %v508
        %v1253 = vsel %vm1227, %v206, %v510
        %v1254 = vsel %vm1227, %v208, %v512
        %v1255 = vsel %vm1227, %v209, %v514
        %v1256 = vsel %vm1227, %v211, %v516
        %v1257 = vsel %vm1227, %v212, %v518
        %v1258 = vsel %vm1227, %v214, %v520
        %v1259 = vsel %vm1227, %v215, %v522
        %vm1260 = vcmask 64512
        %v1261 = vsel %vm1260, %v1228, %v556
        %v1262 = vsel %vm1260, %v1229, %v558
        %v1263 = vsel %vm1260, %v1230, %v560
        %v1264 = vsel %vm1260, %v1231, %v562
        %v1265 = vsel %vm1260, %v1232, %v564
        %v1266 = vsel %vm1260, %v1233, %v566
        %v1267 = vsel %vm1260, %v1234, %v568
        %v1268 = vsel %vm1260, %v1235, %v570
        %v1269 = vsel %vm1260, %v1236, %v572
        %v1270 = vsel %vm1260, %v1237, %v574
        %v1271 = vsel %vm1260, %v1238, %v576
        %v1272 = vsel %vm1260, %v1239, %v578
        %v1273 = vsel %vm1260, %v1240, %v580
        %v1274 = vsel %vm1260, %v1241, %v582
        %v1275 = vsel %vm1260, %v1242, %v584
        %v1276 = vsel %vm1260, %v1243, %v586
        %v1277 = vsel %vm1260, %v1244, %v588
        %v1278 = vsel %vm1260, %v1245, %v590
        %v1279 = vsel %vm1260, %v1246, %v592
        %v1280 = vsel %vm1260, %v1247, %v594
        %v1281 = vsel %vm1260, %v1248, %v596
        %v1282 = vsel %vm1260, %v1249, %v598
        %v1283 = vsel %vm1260, %v1250, %v600
        %v1284 = vsel %vm1260, %v1251, %v602
        %v1285 = vsel %vm1260, %v1252, %v604
        %v1286 = vsel %vm1260, %v1253, %v606
        %v1287 = vsel %vm1260, %v1254, %v608
        %v1288 = vsel %vm1260, %v1255, %v610
        %v1289 = vsel %vm1260, %v1256, %v612
        %v1290 = vsel %vm1260, %v1257, %v614
        %v1291 = vsel %vm1260, %v1258, %v616
        %v1292 = vsel %vm1260, %v1259, %v618
        %vm1293 = vcmask 97280
        %v1294 = vsel %vm1293, %v1261, %v652
        %v1295 = vsel %vm1293, %v1262, %v654
        %v1296 = vsel %vm1293, %v1263, %v656
        %v1297 = vsel %vm1293, %v1264, %v658
        %v1298 = vsel %vm1293, %v1265, %v660
        %v1299 = vsel %vm1293, %v1266, %v662
        %v1300 = vsel %vm1293, %v1267, %v664
        %v1301 = vsel %vm1293, %v1268, %v666
        %v1302 = vsel %vm1293, %v1269, %v668
        %v1303 = vsel %vm1293, %v1270, %v670
        %v1304 = vsel %vm1293, %v1271, %v672
        %v1305 = vsel %vm1293, %v1272, %v674
        %v1306 = vsel %vm1293, %v1273, %v676
        %v1307 = vsel %vm1293, %v1274, %v678
        %v1308 = vsel %vm1293, %v1275, %v680
        %v1309 = vsel %vm1293, %v1276, %v682
        %v1310 = vsel %vm1293, %v1277, %v684
        %v1311 = vsel %vm1293, %v1278, %v686
        %v1312 = vsel %vm1293, %v1279, %v688
        %v1313 = vsel %vm1293, %v1280, %v690
        %v1314 = vsel %vm1293, %v1281, %v692
        %v1315 = vsel %vm1293, %v1282, %v694
        %v1316 = vsel %vm1293, %v1283, %v696
        %v1317 = vsel %vm1293, %v1284, %v698
        %v1318 = vsel %vm1293, %v1285, %v700
        %v1319 = vsel %vm1293, %v1286, %v702
        %v1320 = vsel %vm1293, %v1287, %v704
        %v1321 = vsel %vm1293, %v1288, %v706
        %v1322 = vsel %vm1293, %v1289, %v708
        %v1323 = vsel %vm1293, %v1290, %v710
        %v1324 = vsel %vm1293, %v1291, %v712
        %v1325 = vsel %vm1293, %v1292, %v714
        %vm1326 = vcmask 130048
        %v1327 = vsel %vm1326, %v1294, %v748
        %v1328 = vsel %vm1326, %v1295, %v750
        %v1329 = vsel %vm1326, %v1296, %v752
        %v1330 = vsel %vm1326, %v1297, %v754
        %v1331 = vsel %vm1326, %v1298, %v756
        %v1332 = vsel %vm1326, %v1299, %v758
        %v1333 = vsel %vm1326, %v1300, %v760
        %v1334 = vsel %vm1326, %v1301, %v762
        %v1335 = vsel %vm1326, %v1302, %v764
        %v1336 = vsel %vm1326, %v1303, %v766
        %v1337 = vsel %vm1326, %v1304, %v768
        %v1338 = vsel %vm1326, %v1305, %v770
        %v1339 = vsel %vm1326, %v1306, %v772
        %v1340 = vsel %vm1326, %v1307, %v774
        %v1341 = vsel %vm1326, %v1308, %v776
        %v1342 = vsel %vm1326, %v1309, %v778
        %v1343 = vsel %vm1326, %v1310, %v780
        %v1344 = vsel %vm1326, %v1311, %v782
        %v1345 = vsel %vm1326, %v1312, %v784
        %v1346 = vsel %vm1326, %v1313, %v786
        %v1347 = vsel %vm1326, %v1314, %v788
        %v1348 = vsel %vm1326, %v1315, %v790
        %v1349 = vsel %vm1326, %v1316, %v792
        %v1350 = vsel %vm1326, %v1317, %v794
        %v1351 = vsel %vm1326, %v1318, %v796
        %v1352 = vsel %vm1326, %v1319, %v798
        %v1353 = vsel %vm1326, %v1320, %v800
        %v1354 = vsel %vm1326, %v1321, %v802
        %v1355 = vsel %vm1326, %v1322, %v804
        %v1356 = vsel %vm1326, %v1323, %v806
        %v1357 = vsel %vm1326, %v1324, %v808
        %v1358 = vsel %vm1326, %v1325, %v810
        %vm1359 = vcmask 162816
        %v1360 = vsel %vm1359, %v1327, %v844
        %v1361 = vsel %vm1359, %v1328, %v846
        %v1362 = vsel %vm1359, %v1329, %v848
        %v1363 = vsel %vm1359, %v1330, %v850
        %v1364 = vsel %vm1359, %v1331, %v852
        %v1365 = vsel %vm1359, %v1332, %v854
        %v1366 = vsel %vm1359, %v1333, %v856
        %v1367 = vsel %vm1359, %v1334, %v858
        %v1368 = vsel %vm1359, %v1335, %v860
        %v1369 = vsel %vm1359, %v1336, %v862
        %v1370 = vsel %vm1359, %v1337, %v864
        %v1371 = vsel %vm1359, %v1338, %v866
        %v1372 = vsel %vm1359, %v1339, %v868
        %v1373 = vsel %vm1359, %v1340, %v870
        %v1374 = vsel %vm1359, %v1341, %v872
        %v1375 = vsel %vm1359, %v1342, %v874
        %v1376 = vsel %vm1359, %v1343, %v876
        %v1377 = vsel %vm1359, %v1344, %v878
        %v1378 = vsel %vm1359, %v1345, %v880
        %v1379 = vsel %vm1359, %v1346, %v882
        %v1380 = vsel %vm1359, %v1347, %v884
        %v1381 = vsel %vm1359, %v1348, %v886
        %v1382 = vsel %vm1359, %v1349, %v888
        %v1383 = vsel %vm1359, %v1350, %v890
        %v1384 = vsel %vm1359, %v1351, %v892
        %v1385 = vsel %vm1359, %v1352, %v894
        %v1386 = vsel %vm1359, %v1353, %v896
        %v1387 = vsel %vm1359, %v1354, %v898
        %v1388 = vsel %vm1359, %v1355, %v900
        %v1389 = vsel %vm1359, %v1356, %v902
        %v1390 = vsel %vm1359, %v1357, %v904
        %v1391 = vsel %vm1359, %v1358, %v906
        %vm1392 = vcmask 195584
        %v1393 = vsel %vm1392, %v1360, %v940
        %v1394 = vsel %vm1392, %v1361, %v942
        %v1395 = vsel %vm1392, %v1362, %v944
        %v1396 = vsel %vm1392, %v1363, %v946
        %v1397 = vsel %vm1392, %v1364, %v948
        %v1398 = vsel %vm1392, %v1365, %v950
        %v1399 = vsel %vm1392, %v1366, %v952
        %v1400 = vsel %vm1392, %v1367, %v954
        %v1401 = vsel %vm1392, %v1368, %v956
        %v1402 = vsel %vm1392, %v1369, %v958
        %v1403 = vsel %vm1392, %v1370, %v960
        %v1404 = vsel %vm1392, %v1371, %v962
        %v1405 = vsel %vm1392, %v1372, %v964
        %v1406 = vsel %vm1392, %v1373, %v966
        %v1407 = vsel %vm1392, %v1374, %v968
        %v1408 = vsel %vm1392, %v1375, %v970
        %v1409 = vsel %vm1392, %v1376, %v972
        %v1410 = vsel %vm1392, %v1377, %v974
        %v1411 = vsel %vm1392, %v1378, %v976
        %v1412 = vsel %vm1392, %v1379, %v978
        %v1413 = vsel %vm1392, %v1380, %v980
        %v1414 = vsel %vm1392, %v1381, %v982
        %v1415 = vsel %vm1392, %v1382, %v984
        %v1416 = vsel %vm1392, %v1383, %v986
        %v1417 = vsel %vm1392, %v1384, %v988
        %v1418 = vsel %vm1392, %v1385, %v990
        %v1419 = vsel %vm1392, %v1386, %v992
        %v1420 = vsel %vm1392, %v1387, %v994
        %v1421 = vsel %vm1392, %v1388, %v996
        %v1422 = vsel %vm1392, %v1389, %v998
        %v1423 = vsel %vm1392, %v1390, %v1000
        %v1424 = vsel %vm1392, %v1391, %v1002
        %vm1425 = vcmask 228352
        %v1426 = vsel %vm1425, %v1393, %v1036
        %v1427 = vsel %vm1425, %v1394, %v1038
        %v1428 = vsel %vm1425, %v1395, %v1040
        %v1429 = vsel %vm1425, %v1396, %v1042
        %v1430 = vsel %vm1425, %v1397, %v1044
        %v1431 = vsel %vm1425, %v1398, %v1046
        %v1432 = vsel %vm1425, %v1399, %v1048
        %v1433 = vsel %vm1425, %v1400, %v1050
        %v1434 = vsel %vm1425, %v1401, %v1052
        %v1435 = vsel %vm1425, %v1402, %v1054
        %v1436 = vsel %vm1425, %v1403, %v1056
        %v1437 = vsel %vm1425, %v1404, %v1058
        %v1438 = vsel %vm1425, %v1405, %v1060
        %v1439 = vsel %vm1425, %v1406, %v1062
        %v1440 = vsel %vm1425, %v1407, %v1064
        %v1441 = vsel %vm1425, %v1408, %v1066
        %v1442 = vsel %vm1425, %v1409, %v1068
        %v1443 = vsel %vm1425, %v1410, %v1070
        %v1444 = vsel %vm1425, %v1411, %v1072
        %v1445 = vsel %vm1425, %v1412, %v1074
        %v1446 = vsel %vm1425, %v1413, %v1076
        %v1447 = vsel %vm1425, %v1414, %v1078
        %v1448 = vsel %vm1425, %v1415, %v1080
        %v1449 = vsel %vm1425, %v1416, %v1082
        %v1450 = vsel %vm1425, %v1417, %v1084
        %v1451 = vsel %vm1425, %v1418, %v1086
        %v1452 = vsel %vm1425, %v1419, %v1088
        %v1453 = vsel %vm1425, %v1420, %v1090
        %v1454 = vsel %vm1425, %v1421, %v1092
        %v1455 = vsel %vm1425, %v1422, %v1094
        %v1456 = vsel %vm1425, %v1423, %v1096
        %v1457 = vsel %vm1425, %v1424, %v1098
        %vm1458 = vcmask 261120
        %v1459 = vsel %vm1458, %v1426, %v1132
        %v1460 = vsel %vm1458, %v1427, %v1134
        %v1461 = vsel %vm1458, %v1428, %v1136
        %v1462 = vsel %vm1458, %v1429, %v1138
        %v1463 = vsel %vm1458, %v1430, %v1140
        %v1464 = vsel %vm1458, %v1431, %v1142
        %v1465 = vsel %vm1458, %v1432, %v1144
        %v1466 = vsel %vm1458, %v1433, %v1146
        %v1467 = vsel %vm1458, %v1434, %v1148
        %v1468 = vsel %vm1458, %v1435, %v1150
        %v1469 = vsel %vm1458, %v1436, %v1152
        %v1470 = vsel %vm1458, %v1437, %v1154
        %v1471 = vsel %vm1458, %v1438, %v1156
        %v1472 = vsel %vm1458, %v1439, %v1158
        %v1473 = vsel %vm1458, %v1440, %v1160
        %v1474 = vsel %vm1458, %v1441, %v1162
        %v1475 = vsel %vm1458, %v1442, %v1164
        %v1476 = vsel %vm1458, %v1443, %v1166
        %v1477 = vsel %vm1458, %v1444, %v1168
        %v1478 = vsel %vm1458, %v1445, %v1170
        %v1479 = vsel %vm1458, %v1446, %v1172
        %v1480 = vsel %vm1458, %v1447, %v1174
        %v1481 = vsel %vm1458, %v1448, %v1176
        %v1482 = vsel %vm1458, %v1449, %v1178
        %v1483 = vsel %vm1458, %v1450, %v1180
        %v1484 = vsel %vm1458, %v1451, %v1182
        %v1485 = vsel %vm1458, %v1452, %v1184
        %v1486 = vsel %vm1458, %v1453, %v1186
        %v1487 = vsel %vm1458, %v1454, %v1188
        %v1488 = vsel %vm1458, %v1455, %v1190
        %v1489 = vsel %vm1458, %v1456, %v1192
        %v1490 = vsel %vm1458, %v1457, %v1194
        %v1491 = vld [vmem:[%s1] sm:$0xff]
        %v1492 = vld [vmem:[%s1 + $0x8] sm:$0xff]
        %v1493 = vld [vmem:[%s1 + $0x10] sm:$0xff]
        %v1494 = vld [vmem:[%s1 + $0x18] sm:$0xff]
        %v1495 = vld [vmem:[%s1 + $0x20] sm:$0xf]
        %v1496 = vld [vmem:[%s2] sm:$0x1]
        %v1498 = vlaneseq
        %v1499 = vshrl.u32 %v1498, 7
        %v1500 = vsub.s32 0, %v1499
        %v1501 = vrot.slane %v1496, %v1500
        %vm1503 = vcmask 293888
        %v1505 = vsel %vm1503, %v1459, 0
        %v1508 = vsel %vm1503, %v1460, 0
        %v1511 = vsel %vm1503, %v1461, 0
        %v1514 = vsel %vm1503, %v1462, 0
        %v1517 = vsel %vm1503, %v1463, 0
        %v1520 = vsel %vm1503, %v1464, 0
        %v1523 = vsel %vm1503, %v1465, 0
        %v1526 = vsel %vm1503, %v1466, 0
        %v1529 = vsel %vm1503, %v1467, 0
        %v1532 = vsel %vm1503, %v1468, 0
        %v1535 = vsel %vm1503, %v1469, 0
        %v1538 = vsel %vm1503, %v1470, 0
        %v1541 = vsel %vm1503, %v1471, 0
        %v1544 = vsel %vm1503, %v1472, 0
        %v1547 = vsel %vm1503, %v1473, 0
        %v1550 = vsel %vm1503, %v1474, 0
        %v1553 = vsel %vm1503, %v1475, 0
        %v1556 = vsel %vm1503, %v1476, 0
        %v1559 = vsel %vm1503, %v1477, 0
        %v1562 = vsel %vm1503, %v1478, 0
        %v1565 = vsel %vm1503, %v1479, 0
        %v1568 = vsel %vm1503, %v1480, 0
        %v1571 = vsel %vm1503, %v1481, 0
        %v1574 = vsel %vm1503, %v1482, 0
        %v1577 = vsel %vm1503, %v1483, 0
        %v1580 = vsel %vm1503, %v1484, 0
        %v1583 = vsel %vm1503, %v1485, 0
        %v1586 = vsel %vm1503, %v1486, 0
        %v1589 = vsel %vm1503, %v1487, 0
        %v1592 = vsel %vm1503, %v1488, 0
        %v1595 = vsel %vm1503, %v1489, 0
        %v1598 = vsel %vm1503, %v1490, 0
        %vm1600 = vcmask 1043456
        %v1602 = vsel %vm1600, %v1495, 0
        %1604 = vmatprep.subr.mxu0 0.0
        %1605 = vmatpush1.msra.mxu0 0.0
        %1606 = vmatprep.subr.mxu0 0.0
        %1607 = vmatpush1.msra.mxu0 0.0
        %1608 = vmatprep.subr.mxu0 0.0
        %1609 = vmatpush1.msra.mxu0 0.0
        %1610 = vmatprep.subr.mxu0 0.0
        %1611 = vmatpush1.msra.mxu0 0.0
        %1612 = vmatprep.subr.mxu0 0.0
        %1613 = vmatpush1.msra.mxu0 0.0
        %1614 = vmatprep.subr.mxu0 0.0
        %1615 = vmatpush1.msra.mxu0 0.0
        %1616 = vmatprep.subr.mxu0 0.0
        %1617 = vmatpush1.msra.mxu0 0.0
        %1618 = vmatprep.subr.mxu0 0.0
        %1619 = vmatpush1.msra.mxu0 0.0
        %1620 = vmatprep.subr.mxu0 0.0
        %1621 = vmatpush1.msra.mxu0 0.0
        %1622 = vmatprep.subr.mxu0 0.0
        %1623 = vmatpush1.msra.mxu0 0.0
        %1624 = vmatprep.subr.mxu0 0.0
        %1625 = vmatpush1.msra.mxu0 0.0
        %1626 = vmatprep.subr.mxu0 0.0
        %1627 = vmatpush1.msra.mxu0 %v1602
        %1628 = vmatprep.subr.mxu0 0.0
        %1629 = vmatpush1.msra.mxu0 %v1494
        %1630 = vmatprep.subr.mxu0 0.0
        %1631 = vmatpush1.msra.mxu0 %v1493
        %1632 = vmatprep.subr.mxu0 0.0
        %1633 = vmatpush1.msra.mxu0 %v1492
        %1634 = vmatprep.subr.mxu0 0.0
        %1635 = vmatpush1.msra.mxu0 %v1491
        %1636 = vmatprep.subr.mxu0 0.0
        %1637 = vmatpush2.msra.mxu0 0.0
        %1638 = vmatprep.subr.mxu0 0.0
        %1639 = vmatpush2.msra.mxu0 0.0
        %1640 = vmatprep.subr.mxu0 0.0
        %1641 = vmatpush2.msra.mxu0 0.0
        %1642 = vmatprep.subr.mxu0 0.0
        %1643 = vmatpush2.msra.mxu0 0.0
        %1644 = vmatprep.subr.mxu0 0.0
        %1645 = vmatpush2.msra.mxu0 0.0
        %1646 = vmatprep.subr.mxu0 0.0
        %1647 = vmatpush2.msra.mxu0 0.0
        %1648 = vmatprep.subr.mxu0 0.0
        %1649 = vmatpush2.msra.mxu0 0.0
        %1650 = vmatprep.subr.mxu0 0.0
        %1651 = vmatpush2.msra.mxu0 0.0
        %1652 = vmatprep.subr.mxu0 0.0
        %1653 = vmatpush2.msra.mxu0 0.0
        %1654 = vmatprep.subr.mxu0 0.0
        %1655 = vmatpush2.msra.mxu0 0.0
        %1656 = vmatprep.subr.mxu0 0.0
        %1657 = vmatpush2.msra.mxu0 0.0
        %1658 = vmatprep.subr.mxu0 0.0
        %1659 = vmatpush2.msra.mxu0 0.0
        %1660 = vmatprep.subr.mxu0 0.0
        %1661 = vmatpush2.msra.mxu0 0.0
        %1662 = vmatprep.subr.mxu0 0.0
        %1663 = vmatpush2.msra.mxu0 0.0
        %1664 = vmatprep.subr.mxu0 0.0
        %1665 = vmatpush2.msra.mxu0 0.0
        %1666 = vmatprep.subr.mxu0 0.0
        %1667 = vmatpush2.msra.mxu0 0.0
        %1668 = vmatprep.mubr.f32.mxu0 0.0
        %1669 = vmatmul.mubr.f32.gmra.mxu0 %v1505
        %v1670 = vpop.f32.mrf.mxu0
        %v1671 = vadd.f32 %v1501, %v1670
        %v1672 = vpop.f32.mrf.mxu0
        %1673 = vmatprep.mubr.f32.mxu0 0.0
        %1674 = vmatmul.mubr.f32.gmra.mxu0 %v1508
        %v1675 = vpop.f32.mrf.mxu0
        %v1676 = vadd.f32 %v1501, %v1675
        %v1677 = vpop.f32.mrf.mxu0
        %1678 = vmatprep.mubr.f32.mxu0 0.0
        %1679 = vmatmul.mubr.f32.gmra.mxu0 %v1511
        %v1680 = vpop.f32.mrf.mxu0
        %v1681 = vadd.f32 %v1501, %v1680
        %v1682 = vpop.f32.mrf.mxu0
        %1683 = vmatprep.mubr.f32.mxu0 0.0
        %1684 = vmatmul.mubr.f32.gmra.mxu0 %v1514
        %v1685 = vpop.f32.mrf.mxu0
        %v1686 = vadd.f32 %v1501, %v1685
        %v1687 = vpop.f32.mrf.mxu0
        %1688 = vmatprep.mubr.f32.mxu0 0.0
        %1689 = vmatmul.mubr.f32.gmra.mxu0 %v1517
        %v1690 = vpop.f32.mrf.mxu0
        %v1691 = vadd.f32 %v1501, %v1690
        %v1692 = vpop.f32.mrf.mxu0
        %1693 = vmatprep.mubr.f32.mxu0 0.0
        %1694 = vmatmul.mubr.f32.gmra.mxu0 %v1520
        %v1695 = vpop.f32.mrf.mxu0
        %v1696 = vadd.f32 %v1501, %v1695
        %v1697 = vpop.f32.mrf.mxu0
        %1698 = vmatprep.mubr.f32.mxu0 0.0
        %1699 = vmatmul.mubr.f32.gmra.mxu0 %v1523
        %v1700 = vpop.f32.mrf.mxu0
        %v1701 = vadd.f32 %v1501, %v1700
        %v1702 = vpop.f32.mrf.mxu0
        %1703 = vmatprep.mubr.f32.mxu0 0.0
        %1704 = vmatmul.mubr.f32.gmra.mxu0 %v1526
        %v1705 = vpop.f32.mrf.mxu0
        %v1706 = vadd.f32 %v1501, %v1705
        %v1707 = vpop.f32.mrf.mxu0
        %1708 = vmatprep.mubr.f32.mxu0 0.0
        %1709 = vmatmul.mubr.f32.gmra.mxu0 %v1529
        %v1710 = vpop.f32.mrf.mxu0
        %v1711 = vadd.f32 %v1501, %v1710
        %v1712 = vpop.f32.mrf.mxu0
        %1713 = vmatprep.mubr.f32.mxu0 0.0
        %1714 = vmatmul.mubr.f32.gmra.mxu0 %v1532
        %v1715 = vpop.f32.mrf.mxu0
        %v1716 = vadd.f32 %v1501, %v1715
        %v1717 = vpop.f32.mrf.mxu0
        %1718 = vmatprep.mubr.f32.mxu0 0.0
        %1719 = vmatmul.mubr.f32.gmra.mxu0 %v1535
        %v1720 = vpop.f32.mrf.mxu0
        %v1721 = vadd.f32 %v1501, %v1720
        %v1722 = vpop.f32.mrf.mxu0
        %1723 = vmatprep.mubr.f32.mxu0 0.0
        %1724 = vmatmul.mubr.f32.gmra.mxu0 %v1538
        %v1725 = vpop.f32.mrf.mxu0
        %v1726 = vadd.f32 %v1501, %v1725
        %v1727 = vpop.f32.mrf.mxu0
        %1728 = vmatprep.mubr.f32.mxu0 0.0
        %1729 = vmatmul.mubr.f32.gmra.mxu0 %v1541
        %v1730 = vpop.f32.mrf.mxu0
        %v1731 = vadd.f32 %v1501, %v1730
        %v1732 = vpop.f32.mrf.mxu0
        %1733 = vmatprep.mubr.f32.mxu0 0.0
        %1734 = vmatmul.mubr.f32.gmra.mxu0 %v1544
        %v1735 = vpop.f32.mrf.mxu0
        %v1736 = vadd.f32 %v1501, %v1735
        %v1737 = vpop.f32.mrf.mxu0
        %1738 = vmatprep.mubr.f32.mxu0 0.0
        %1739 = vmatmul.mubr.f32.gmra.mxu0 %v1547
        %v1740 = vpop.f32.mrf.mxu0
        %v1741 = vadd.f32 %v1501, %v1740
        %v1742 = vpop.f32.mrf.mxu0
        %1743 = vmatprep.mubr.f32.mxu0 0.0
        %1744 = vmatmul.mubr.f32.gmra.mxu0 %v1550
        %v1745 = vpop.f32.mrf.mxu0
        %v1746 = vadd.f32 %v1501, %v1745
        %v1747 = vpop.f32.mrf.mxu0
        %1748 = vmatprep.mubr.f32.mxu0 0.0
        %1749 = vmatmul.mubr.f32.gmra.mxu0 %v1553
        %v1750 = vpop.f32.mrf.mxu0
        %v1751 = vadd.f32 %v1501, %v1750
        %v1752 = vpop.f32.mrf.mxu0
        %1753 = vmatprep.mubr.f32.mxu0 0.0
        %1754 = vmatmul.mubr.f32.gmra.mxu0 %v1556
        %v1755 = vpop.f32.mrf.mxu0
        %v1756 = vadd.f32 %v1501, %v1755
        %v1757 = vpop.f32.mrf.mxu0
        %1758 = vmatprep.mubr.f32.mxu0 0.0
        %1759 = vmatmul.mubr.f32.gmra.mxu0 %v1559
        %v1760 = vpop.f32.mrf.mxu0
        %v1761 = vadd.f32 %v1501, %v1760
        %v1762 = vpop.f32.mrf.mxu0
        %1763 = vmatprep.mubr.f32.mxu0 0.0
        %1764 = vmatmul.mubr.f32.gmra.mxu0 %v1562
        %v1765 = vpop.f32.mrf.mxu0
        %v1766 = vadd.f32 %v1501, %v1765
        %v1767 = vpop.f32.mrf.mxu0
        %1768 = vmatprep.mubr.f32.mxu0 0.0
        %1769 = vmatmul.mubr.f32.gmra.mxu0 %v1565
        %v1770 = vpop.f32.mrf.mxu0
        %v1771 = vadd.f32 %v1501, %v1770
        %v1772 = vpop.f32.mrf.mxu0
        %1773 = vmatprep.mubr.f32.mxu0 0.0
        %1774 = vmatmul.mubr.f32.gmra.mxu0 %v1568
        %v1775 = vpop.f32.mrf.mxu0
        %v1776 = vadd.f32 %v1501, %v1775
        %v1777 = vpop.f32.mrf.mxu0
        %1778 = vmatprep.mubr.f32.mxu0 0.0
        %1779 = vmatmul.mubr.f32.gmra.mxu0 %v1571
        %v1780 = vpop.f32.mrf.mxu0
        %v1781 = vadd.f32 %v1501, %v1780
        %v1782 = vpop.f32.mrf.mxu0
        %1783 = vmatprep.mubr.f32.mxu0 0.0
        %1784 = vmatmul.mubr.f32.gmra.mxu0 %v1574
        %v1785 = vpop.f32.mrf.mxu0
        %v1786 = vadd.f32 %v1501, %v1785
        %v1787 = vpop.f32.mrf.mxu0
        %1788 = vmatprep.mubr.f32.mxu0 0.0
        %1789 = vmatmul.mubr.f32.gmra.mxu0 %v1577
        %v1790 = vpop.f32.mrf.mxu0
        %v1791 = vadd.f32 %v1501, %v1790
        %v1792 = vpop.f32.mrf.mxu0
        %1793 = vmatprep.mubr.f32.mxu0 0.0
        %1794 = vmatmul.mubr.f32.gmra.mxu0 %v1580
        %v1795 = vpop.f32.mrf.mxu0
        %v1796 = vadd.f32 %v1501, %v1795
        %v1797 = vpop.f32.mrf.mxu0
        %1798 = vmatprep.mubr.f32.mxu0 0.0
        %1799 = vmatmul.mubr.f32.gmra.mxu0 %v1583
        %v1800 = vpop.f32.mrf.mxu0
        %v1801 = vadd.f32 %v1501, %v1800
        %v1802 = vpop.f32.mrf.mxu0
        %1803 = vmatprep.mubr.f32.mxu0 0.0
        %1804 = vmatmul.mubr.f32.gmra.mxu0 %v1586
        %v1805 = vpop.f32.mrf.mxu0
        %v1806 = vadd.f32 %v1501, %v1805
        %v1807 = vpop.f32.mrf.mxu0
        %1808 = vmatprep.mubr.f32.mxu0 0.0
        %1809 = vmatmul.mubr.f32.gmra.mxu0 %v1589
        %v1810 = vpop.f32.mrf.mxu0
        %v1811 = vadd.f32 %v1501, %v1810
        %v1812 = vpop.f32.mrf.mxu0
        %1813 = vmatprep.mubr.f32.mxu0 0.0
        %1814 = vmatmul.mubr.f32.gmra.mxu0 %v1592
        %v1815 = vpop.f32.mrf.mxu0
        %v1816 = vadd.f32 %v1501, %v1815
        %v1817 = vpop.f32.mrf.mxu0
        %1818 = vmatprep.mubr.f32.mxu0 0.0
        %1819 = vmatmul.mubr.f32.gmra.mxu0 %v1595
        %v1820 = vpop.f32.mrf.mxu0
        %v1821 = vadd.f32 %v1501, %v1820
        %v1822 = vpop.f32.mrf.mxu0
        %1823 = vmatprep.mubr.f32.mxu0 0.0
        %1824 = vmatmul.mubr.f32.gmra.mxu0 %v1598
        %v1825 = vpop.f32.mrf.mxu0
        %v1826 = vadd.f32 %v1501, %v1825
        %v1827 = vpop.f32.mrf.mxu0
        %1828 = vdwg.mxu0
        %1829 = vxpose.xlu0.b32.start [1/16] %v1671, 128
        %1830 = vxpose.xlu0.b32.cont [2/16] %v1676, 128
        %1831 = vxpose.xlu0.b32.cont [3/16] %v1681, 128
        %1832 = vxpose.xlu0.b32.cont [4/16] %v1686, 128
        %1833 = vxpose.xlu0.b32.cont [5/16] %v1691, 128
        %1834 = vxpose.xlu0.b32.cont [6/16] %v1696, 128
        %1835 = vxpose.xlu0.b32.cont [7/16] %v1701, 128
        %1836 = vxpose.xlu0.b32.cont [8/16] %v1706, 128
        %1837 = vxpose.xlu0.b32.cont [9/16] %v1711, 128
        %1838 = vxpose.xlu0.b32.cont [10/16] %v1716, 128
        %1839 = vxpose.xlu0.b32.cont [11/16] %v1721, 128
        %1840 = vxpose.xlu0.b32.cont [12/16] %v1726, 128
        %1841 = vxpose.xlu0.b32.cont [13/16] %v1731, 128
        %1842 = vxpose.xlu0.b32.cont [14/16] %v1736, 128
        %1843 = vxpose.xlu0.b32.cont [15/16] %v1741, 128
        %1844 = vxpose.xlu0.b32.end [16/16] %v1746, 128
        %v1845 = vpop.trf.xlu0
        %v1846 = vpop.trf.xlu0
        %v1847 = vpop.trf.xlu0
        %v1848 = vpop.trf.xlu0
        %v1849 = vpop.trf.xlu0
        %v1850 = vpop.trf.xlu0
        %v1851 = vpop.trf.xlu0
        %v1852 = vpop.trf.xlu0
        %v1853 = vpop.trf.xlu0
        %v1854 = vpop.trf.xlu0
        %v1855 = vpop.trf.xlu0
        %v1856 = vpop.trf.xlu0
        %v1857 = vpop.trf.xlu0
        %v1858 = vpop.trf.xlu0
        %v1859 = vpop.trf.xlu0
        %v1860 = vpop.trf.xlu0
        %1861 = vxpose.xlu0.b32.start [1/16] %v1751, 128
        %1862 = vxpose.xlu0.b32.cont [2/16] %v1756, 128
        %1863 = vxpose.xlu0.b32.cont [3/16] %v1761, 128
        %1864 = vxpose.xlu0.b32.cont [4/16] %v1766, 128
        %1865 = vxpose.xlu0.b32.cont [5/16] %v1771, 128
        %1866 = vxpose.xlu0.b32.cont [6/16] %v1776, 128
        %1867 = vxpose.xlu0.b32.cont [7/16] %v1781, 128
        %1868 = vxpose.xlu0.b32.cont [8/16] %v1786, 128
        %1869 = vxpose.xlu0.b32.cont [9/16] %v1791, 128
        %1870 = vxpose.xlu0.b32.cont [10/16] %v1796, 128
        %1871 = vxpose.xlu0.b32.cont [11/16] %v1801, 128
        %1872 = vxpose.xlu0.b32.cont [12/16] %v1806, 128
        %1873 = vxpose.xlu0.b32.cont [13/16] %v1811, 128
        %1874 = vxpose.xlu0.b32.cont [14/16] %v1816, 128
        %1875 = vxpose.xlu0.b32.cont [15/16] %v1821, 128
        %1876 = vxpose.xlu0.b32.end [16/16] %v1826, 128
        %v1877 = vpop.trf.xlu0
        %v1878 = vpop.trf.xlu0
        %v1879 = vpop.trf.xlu0
        %v1880 = vpop.trf.xlu0
        %v1881 = vpop.trf.xlu0
        %v1882 = vpop.trf.xlu0
        %v1883 = vpop.trf.xlu0
        %v1884 = vpop.trf.xlu0
        %v1885 = vpop.trf.xlu0
        %v1886 = vpop.trf.xlu0
        %v1887 = vpop.trf.xlu0
        %v1888 = vpop.trf.xlu0
        %v1889 = vpop.trf.xlu0
        %v1890 = vpop.trf.xlu0
        %v1891 = vpop.trf.xlu0
        %v1892 = vpop.trf.xlu0
        %1893 = vst [vmem:[%s163] sm:$0xff] %v1845
        %1894 = vst [vmem:[%s163 + $0x8] sm:$0xff] %v1877
        %s1895 = sand.u32 %s93, 1
        %s1896 = scalar_lea.sflag [#allocation3], %s1895
        %s1897 = sand.u32 %s93, 1
        %s1898 = smul.addr %s1897, 16
        %s1899 = scalar_lea.vmem [#allocation2], %s1898
        // Predicated region
        $region33: #{tpu_custom_call.1} parent=31 // pred_check
          %p1900 = pneg %p103
        $region34: #{tpu_custom_call.1} parent=31 // pred_check_branch
          %1902 = sbr.rel (%p1900) target = $region36
        $region35: #{tpu_custom_call.1} parent=31 // pred_region
          %s1904 = ssub.s32 256, 256
          %1905 = vsyncadd %s1896, %s1904
          %s1906 = smul.addr %s17, 2
          %s1907 = smul.addr %s1906, 128
          %s1908 = scalar_lea.hbm %s3, %s1907
          %s1910 = sshll.u32 %s1899, 4
          %s1911 = int_to_ptr.vmem [resolvable:$true] %s1910
          %1913 = dma.vmem_to_hbm [thread:$0]  %s1911, 256, %s1908, %s1896
        $region36: #{tpu_custom_call.1} parent=31 // pred_fallthru
          _
      $region32: #{tpu_custom_call.1} parent=5 // pred_fallthru
        _
      %p1914 = scmp.le.s32.totalorder 2, %s12
      // Predicated region
      $region37: #{tpu_custom_call.1} parent=5 // pred_check
        %p1915 = pneg %p1914
      $region38: #{tpu_custom_call.1} parent=5 // pred_check_branch
        %1917 = sbr.rel (%p1915) target = $region40
      $region39: #{tpu_custom_call.1} parent=5 // pred_region
        %s1918 = ssub.s32 %s12, 2
        // Predicated region
        $region41: #{tpu_custom_call.1} parent=39 // pred_check
          %p1919 = pneg %p109
        $region42: #{tpu_custom_call.1} parent=39 // pred_check_branch
          %1921 = sbr.rel (%p1919) target = $region44
        $region43: #{tpu_custom_call.1} parent=39 // pred_region
          %s1922 = sand.u32 %s94, 1
          %s1923 = scalar_lea.sflag [#allocation3], %s1922
          %s1924 = sand.u32 %s94, 1
          %s1925 = smul.addr %s1924, 16
          %s1926 = scalar_lea.vmem [#allocation2], %s1925
          %1927 = dma.done %s1923, 256
        $region44: #{tpu_custom_call.1} parent=39 // pred_fallthru
          _
      $region40: #{tpu_custom_call.1} parent=5 // pred_fallthru
        _
    $region6: #{tpu_custom_call.1} parent=1 // loop_footer
      %s16 = sadd.s32 1, %s12
    $region7: #{tpu_custom_call.1} parent=1 // loop_footer_branch
      %11 = sbr.rel target = $region3
    $region8: #{tpu_custom_call.1} parent=1 // loop_exit
      _
    %1928 = vsyncpa [#allocation3], 1
    %s1929 = scalar_lea.sflag [#allocation3], 1
    %1930 = vsyncpa %s1929, 1

</llo_original>
